<compile_context>
chip_gen: v6e
topology: v6e:2x2x1
jax: 0.10.0
libtpu: 0.0.40
codegen_flags: <defaults>
</compile_context>

<pallas_src>
import math

import jax
import jax.numpy as jnp
import numpy as np
from jax.experimental import pallas as pl
from jax.experimental.pallas import tpu as pltpu

# ---------------- configuration (small, consistent with the module) ----------------
B = 2          # batch
LT = 8         # len_target
LS = 16        # len_source
D_ATT = 32     # d_att
N_HEADS = 4    # n_heads
D_HEAD = D_ATT // N_HEADS
SCALE = 1.0 / math.sqrt(D_HEAD)


# ---------------------------------- Pallas kernel -----------------------------------
def mhca_kernel(xt_ref, xs_ref, w_ref, bo_ref, out_ref):
    # xt_ref : (B*LT, D)    all target tokens, batch-flattened
    # xs_ref : (B*LS, D)    all source tokens, batch-flattened
    # w_ref  : (4D, D)      sublane-packed [Wq; Wk; Wv; Wo] (each pre-transposed: y = x @ W)
    # bo_ref : (1, D)       output bias
    # out_ref: (B*LT, D)
    xt = xt_ref[...]                                   # (B*LT, D)
    xs = xs_ref[...]                                   # (B*LS, D)

    # Sublane slices of the packed weight slab are free (8-row aligned, D=32).
    wq = w_ref[0 * D_ATT:1 * D_ATT, :]                 # (D, D)
    wk = w_ref[1 * D_ATT:2 * D_ATT, :]
    wv = w_ref[2 * D_ATT:3 * D_ATT, :]
    wo = w_ref[3 * D_ATT:4 * D_ATT, :]

    # Projections on the full batch-flattened slabs (3 MXU matmuls total).
    q_all = jnp.dot(xt, wq, preferred_element_type=jnp.float32)   # (B*LT, D)
    k_all = jnp.dot(xs, wk, preferred_element_type=jnp.float32)   # (B*LS, D)
    v_all = jnp.dot(xs, wv, preferred_element_type=jnp.float32)   # (B*LS, D)

    # Single XLU transpose for the whole K slab (not per batch / per head).
    kT_all = k_all.T                                               # (D, B*LS)

    # --- scores for every (batch, head) pair, stacked along the SUBLANE axis ---------
    score_tiles = []
    for b in range(B):                                 # static, tiny loops
        for h in range(N_HEADS):
            lo = h * D_HEAD
            hi = lo + D_HEAD
            q_bh = q_all[b * LT:(b + 1) * LT, lo:hi]               # (LT, dh)
            kT_bh = kT_all[lo:hi, b * LS:(b + 1) * LS]             # (dh, LS)
            score_tiles.append(
                jnp.dot(q_bh, kT_bh, preferred_element_type=jnp.float32))  # (LT, LS)
    s_all = jnp.concatenate(score_tiles, axis=0) * SCALE           # (B*H*LT, LS) = (64, 16)

    # --- ONE batched, numerically-stable softmax over the source dimension -----------
    s_all = s_all - jnp.max(s_all, axis=-1, keepdims=True)
    p_all = jnp.exp(s_all)
    p_all = p_all * pl.reciprocal(jnp.sum(p_all, axis=-1, keepdims=True), approx=False)

    # --- PV + output projection, accumulated per head (no lane-axis concat) ----------
    bias = bo_ref[...]                                             # (1, D)
    for b in range(B):
        v_b = v_all[b * LS:(b + 1) * LS, :]                        # (LS, D)
        y_b = None
        for h in range(N_HEADS):
            lo = h * D_HEAD
            hi = lo + D_HEAD
            idx = b * N_HEADS + h
            p_bh = p_all[idx * LT:(idx + 1) * LT, :]               # (LT, LS)
            o_bh = jnp.dot(p_bh, v_b[:, lo:hi],
                           preferred_element_type=jnp.float32)     # (LT, dh)
            term = jnp.dot(o_bh, wo[lo:hi, :],
                           preferred_element_type=jnp.float32)     # (LT, D)
            y_b = term if y_b is None else y_b + term
        # Dropout(p=0.0) == identity; write each batch's rows straight into the
        # sublane-aligned output slice (no concat on the output path).
        out_ref[b * LT:(b + 1) * LT, :] = (y_b + bias).astype(out_ref.dtype)


# ------------------------------------ wrappers ---------------------------------------
def pack_mhca_weights(wq, wk, wv, wo):
    """Pack the four (D, D) weights into one sublane-stacked (4D, D) slab (do ONCE)."""
    return jnp.concatenate([wq, wk, wv, wo], axis=0)


def mhca_forward(x_target, x_source, w_packed, bo):
    """x_target: (B, LT, D), x_source: (B, LS, D); w_packed: (4D, D); bo: (D,)."""
    xt2d = x_target.reshape(B * LT, D_ATT)              # free contiguous reshape
    xs2d = x_source.reshape(B * LS, D_ATT)
    bo2d = bo.reshape(1, D_ATT)

    out2d = pl.pallas_call(
        mhca_kernel,
        out_shape=jax.ShapeDtypeStruct((B * LT, D_ATT), x_target.dtype),
        in_specs=[
            pl.BlockSpec(memory_space=pltpu.MemorySpace.VMEM),   # x_target (flat)
            pl.BlockSpec(memory_space=pltpu.MemorySpace.VMEM),   # x_source (flat)
            pl.BlockSpec(memory_space=pltpu.MemorySpace.VMEM),   # packed [Wq;Wk;Wv;Wo]
            pl.BlockSpec(memory_space=pltpu.MemorySpace.VMEM),   # bo
        ],
        out_specs=pl.BlockSpec(memory_space=pltpu.MemorySpace.VMEM),
    )(xt2d, xs2d, w_packed, bo2d)

    return out2d.reshape(B, LT, D_ATT)                   # free contiguous reshape


# ------------------------------- pure-JAX reference ---------------------------------
def mhca_reference(x_target, x_source, wq, wk, wv, wo, bo):
    q = x_target @ wq
    k = x_source @ wk
    v = x_source @ wv
    qh = q.reshape(B, LT, N_HEADS, D_HEAD).transpose(0, 2, 1, 3)
    kh = k.reshape(B, LS, N_HEADS, D_HEAD).transpose(0, 2, 1, 3)
    vh = v.reshape(B, LS, N_HEADS, D_HEAD).transpose(0, 2, 1, 3)
    s = jnp.einsum("bhtd,bhsd->bhts", qh, kh) * SCALE
    p = jax.nn.softmax(s, axis=-1)
    o = jnp.einsum("bhts,bhsd->bhtd", p, vh)
    o = o.transpose(0, 2, 1, 3).reshape(B, LT, D_ATT)
    return o @ wo + bo[None, None, :]


# -------------------------------------- main ----------------------------------------
if __name__ == "__main__":
    key = jax.random.PRNGKey(0)
    k_xt, k_xs, k_wq, k_wk, k_wv, k_wo, k_bo = jax.random.split(key, 7)

    x_target = jax.random.normal(k_xt, (B, LT, D_ATT), dtype=jnp.float32)
    x_source = jax.random.normal(k_xs, (B, LS, D_ATT), dtype=jnp.float32)

    # Deterministic synthetic parameters (stored as [D_in, D_out], i.e. torch W^T).
    init_scale = 1.0 / math.sqrt(D_ATT)
    wq = jax.random.normal(k_wq, (D_ATT, D_ATT), dtype=jnp.float32) * init_scale
    wk = jax.random.normal(k_wk, (D_ATT, D_ATT), dtype=jnp.float32) * init_scale
    wv = jax.random.normal(k_wv, (D_ATT, D_ATT), dtype=jnp.float32) * init_scale
    wo = jax.random.normal(k_wo, (D_ATT, D_ATT), dtype=jnp.float32) * init_scale
    bo = jax.random.normal(k_bo, (D_ATT,), dtype=jnp.float32) * init_scale

    # Pack the weight slab once (outside the per-call path).
    w_packed = pack_mhca_weights(wq, wk, wv, wo)

    out = mhca_forward(x_target, x_source, w_packed, bo)
    out = jax.block_until_ready(out)

    ref = mhca_reference(x_target, x_source, wq, wk, wv, wo, bo)
    np.testing.assert_allclose(np.asarray(out), np.asarray(ref), rtol=1e-5, atol=1e-5)

    print("KERNEL_OK")
</pallas_src>

<mosaic_0001>
module attributes {stable_mosaic.version = 11 : i64} {
  func.func @mhca_kernel(%arg0: memref<16x32xf32, #tpu.memory_space<vmem>>, %arg1: memref<32x32xf32, #tpu.memory_space<vmem>>, %arg2: memref<128x32xf32, #tpu.memory_space<vmem>>, %arg3: memref<1x32xf32, #tpu.memory_space<vmem>>, %arg4: memref<16x32xf32, #tpu.memory_space<vmem>>) attributes {dimension_semantics = [], scalar_prefetch = 0 : i64, scratch_operands = 0 : i64, tpu.core_type = #tpu.core_type<tc>} {
    %c0 = arith.constant 0 : index
    %c0_0 = arith.constant 0 : index
    %0 = vector.load %arg0[%c0, %c0_0] : memref<16x32xf32, #tpu.memory_space<vmem>>, vector<16x32xf32>
    %c0_1 = arith.constant 0 : index
    %c0_2 = arith.constant 0 : index
    %1 = vector.load %arg1[%c0_1, %c0_2] : memref<32x32xf32, #tpu.memory_space<vmem>>, vector<32x32xf32>
    %c0_3 = arith.constant 0 : index
    %c0_4 = arith.constant 0 : index
    %2 = vector.load %arg2[%c0_3, %c0_4] : memref<128x32xf32, #tpu.memory_space<vmem>>, vector<32x32xf32>
    %c32 = arith.constant 32 : index
    %c0_5 = arith.constant 0 : index
    %3 = vector.load %arg2[%c32, %c0_5] : memref<128x32xf32, #tpu.memory_space<vmem>>, vector<32x32xf32>
    %c64 = arith.constant 64 : index
    %c0_6 = arith.constant 0 : index
    %4 = vector.load %arg2[%c64, %c0_6] : memref<128x32xf32, #tpu.memory_space<vmem>>, vector<32x32xf32>
    %c96 = arith.constant 96 : index
    %c0_7 = arith.constant 0 : index
    %5 = vector.load %arg2[%c96, %c0_7] : memref<128x32xf32, #tpu.memory_space<vmem>>, vector<32x32xf32>
    %cst = arith.constant dense<0.000000e+00> : vector<16x32xf32>
    %6 = tpu.matmul %0, %2, %cst {dimension_numbers = #tpu.dot_dimension_numbers<[1], [0], [0], [1], [0, 0, 1, 1], [], []>} : vector<16x32xf32>, vector<32x32xf32>, vector<16x32xf32> -> vector<16x32xf32>
    %cst_8 = arith.constant dense<0.000000e+00> : vector<32x32xf32>
    %7 = tpu.matmul %1, %3, %cst_8 {dimension_numbers = #tpu.dot_dimension_numbers<[1], [0], [0], [1], [0, 0, 1, 1], [], []>} : vector<32x32xf32>, vector<32x32xf32>, vector<32x32xf32> -> vector<32x32xf32>
    %cst_9 = arith.constant dense<0.000000e+00> : vector<32x32xf32>
    %8 = tpu.matmul %1, %4, %cst_9 {dimension_numbers = #tpu.dot_dimension_numbers<[1], [0], [0], [1], [0, 0, 1, 1], [], []>} : vector<32x32xf32>, vector<32x32xf32>, vector<32x32xf32> -> vector<32x32xf32>
    %9 = tpu.transpose %7, [1, 0] : vector<32x32xf32> -> vector<32x32xf32>
    %10 = vector.extract_strided_slice %6 {offsets = [0, 0], sizes = [8, 8], strides = [1, 1]} : vector<16x32xf32> to vector<8x8xf32>
    %11 = vector.extract_strided_slice %9 {offsets = [0, 0], sizes = [8, 16], strides = [1, 1]} : vector<32x32xf32> to vector<8x16xf32>
    %cst_10 = arith.constant dense<0.000000e+00> : vector<8x16xf32>
    %12 = tpu.matmul %10, %11, %cst_10 {dimension_numbers = #tpu.dot_dimension_numbers<[1], [0], [0], [1], [0, 0, 1, 1], [], []>} : vector<8x8xf32>, vector<8x16xf32>, vector<8x16xf32> -> vector<8x16xf32>
    %13 = vector.extract_strided_slice %6 {offsets = [0, 8], sizes = [8, 8], strides = [1, 1]} : vector<16x32xf32> to vector<8x8xf32>
    %14 = vector.extract_strided_slice %9 {offsets = [8, 0], sizes = [8, 16], strides = [1, 1]} : vector<32x32xf32> to vector<8x16xf32>
    %cst_11 = arith.constant dense<0.000000e+00> : vector<8x16xf32>
    %15 = tpu.matmul %13, %14, %cst_11 {dimension_numbers = #tpu.dot_dimension_numbers<[1], [0], [0], [1], [0, 0, 1, 1], [], []>} : vector<8x8xf32>, vector<8x16xf32>, vector<8x16xf32> -> vector<8x16xf32>
    %16 = vector.extract_strided_slice %6 {offsets = [0, 16], sizes = [8, 8], strides = [1, 1]} : vector<16x32xf32> to vector<8x8xf32>
    %17 = vector.extract_strided_slice %9 {offsets = [16, 0], sizes = [8, 16], strides = [1, 1]} : vector<32x32xf32> to vector<8x16xf32>
    %cst_12 = arith.constant dense<0.000000e+00> : vector<8x16xf32>
    %18 = tpu.matmul %16, %17, %cst_12 {dimension_numbers = #tpu.dot_dimension_numbers<[1], [0], [0], [1], [0, 0, 1, 1], [], []>} : vector<8x8xf32>, vector<8x16xf32>, vector<8x16xf32> -> vector<8x16xf32>
    %19 = vector.extract_strided_slice %6 {offsets = [0, 24], sizes = [8, 8], strides = [1, 1]} : vector<16x32xf32> to vector<8x8xf32>
    %20 = vector.extract_strided_slice %9 {offsets = [24, 0], sizes = [8, 16], strides = [1, 1]} : vector<32x32xf32> to vector<8x16xf32>
    %cst_13 = arith.constant dense<0.000000e+00> : vector<8x16xf32>
    %21 = tpu.matmul %19, %20, %cst_13 {dimension_numbers = #tpu.dot_dimension_numbers<[1], [0], [0], [1], [0, 0, 1, 1], [], []>} : vector<8x8xf32>, vector<8x16xf32>, vector<8x16xf32> -> vector<8x16xf32>
    %22 = vector.extract_strided_slice %6 {offsets = [8, 0], sizes = [8, 8], strides = [1, 1]} : vector<16x32xf32> to vector<8x8xf32>
    %23 = vector.extract_strided_slice %9 {offsets = [0, 16], sizes = [8, 16], strides = [1, 1]} : vector<32x32xf32> to vector<8x16xf32>
    %cst_14 = arith.constant dense<0.000000e+00> : vector<8x16xf32>
    %24 = tpu.matmul %22, %23, %cst_14 {dimension_numbers = #tpu.dot_dimension_numbers<[1], [0], [0], [1], [0, 0, 1, 1], [], []>} : vector<8x8xf32>, vector<8x16xf32>, vector<8x16xf32> -> vector<8x16xf32>
    %25 = vector.extract_strided_slice %6 {offsets = [8, 8], sizes = [8, 8], strides = [1, 1]} : vector<16x32xf32> to vector<8x8xf32>
    %26 = vector.extract_strided_slice %9 {offsets = [8, 16], sizes = [8, 16], strides = [1, 1]} : vector<32x32xf32> to vector<8x16xf32>
    %cst_15 = arith.constant dense<0.000000e+00> : vector<8x16xf32>
    %27 = tpu.matmul %25, %26, %cst_15 {dimension_numbers = #tpu.dot_dimension_numbers<[1], [0], [0], [1], [0, 0, 1, 1], [], []>} : vector<8x8xf32>, vector<8x16xf32>, vector<8x16xf32> -> vector<8x16xf32>
    %28 = vector.extract_strided_slice %6 {offsets = [8, 16], sizes = [8, 8], strides = [1, 1]} : vector<16x32xf32> to vector<8x8xf32>
    %29 = vector.extract_strided_slice %9 {offsets = [16, 16], sizes = [8, 16], strides = [1, 1]} : vector<32x32xf32> to vector<8x16xf32>
    %cst_16 = arith.constant dense<0.000000e+00> : vector<8x16xf32>
    %30 = tpu.matmul %28, %29, %cst_16 {dimension_numbers = #tpu.dot_dimension_numbers<[1], [0], [0], [1], [0, 0, 1, 1], [], []>} : vector<8x8xf32>, vector<8x16xf32>, vector<8x16xf32> -> vector<8x16xf32>
    %31 = vector.extract_strided_slice %6 {offsets = [8, 24], sizes = [8, 8], strides = [1, 1]} : vector<16x32xf32> to vector<8x8xf32>
    %32 = vector.extract_strided_slice %9 {offsets = [24, 16], sizes = [8, 16], strides = [1, 1]} : vector<32x32xf32> to vector<8x16xf32>
    %cst_17 = arith.constant dense<0.000000e+00> : vector<8x16xf32>
    %33 = tpu.matmul %31, %32, %cst_17 {dimension_numbers = #tpu.dot_dimension_numbers<[1], [0], [0], [1], [0, 0, 1, 1], [], []>} : vector<8x8xf32>, vector<8x16xf32>, vector<8x16xf32> -> vector<8x16xf32>
    %34 = tpu.concatenate %12, %15, %18, %21, %24, %27, %30, %33 in 0 : vector<8x16xf32>, vector<8x16xf32>, vector<8x16xf32>, vector<8x16xf32>, vector<8x16xf32>, vector<8x16xf32>, vector<8x16xf32>, vector<8x16xf32> -> vector<64x16xf32>
    %cst_18 = arith.constant 0.353553385 : f32
    %35 = vector.broadcast %cst_18 : f32 to vector<64x16xf32>
    %36 = arith.mulf %34, %35 : vector<64x16xf32>
    %cst_19 = arith.constant dense<0xFF800000> : vector<64xf32>
    %37 = vector.multi_reduction <maximumf>, %36, %cst_19 [1] : vector<64x16xf32> to vector<64xf32>
    %38 = vector.shape_cast %37 : vector<64xf32> to vector<64x1xf32>
    %39 = vector.broadcast %38 : vector<64x1xf32> to vector<64x16xf32>
    %40 = arith.subf %36, %39 : vector<64x16xf32>
    %41 = math.exp %40 : vector<64x16xf32>
    %cst_20 = arith.constant dense<0.000000e+00> : vector<64xf32>
    %42 = vector.multi_reduction <add>, %41, %cst_20 [1] : vector<64x16xf32> to vector<64xf32>
    %43 = vector.shape_cast %42 : vector<64xf32> to vector<64x1xf32>
    %44 = tpu.reciprocal %43 : vector<64x1xf32> -> vector<64x1xf32>
    %45 = vector.broadcast %44 : vector<64x1xf32> to vector<64x16xf32>
    %46 = arith.mulf %41, %45 : vector<64x16xf32>
    %c0_21 = arith.constant 0 : index
    %c0_22 = arith.constant 0 : index
    %47 = vector.load %arg3[%c0_21, %c0_22] : memref<1x32xf32, #tpu.memory_space<vmem>>, vector<1x32xf32>
    %48 = vector.extract_strided_slice %8 {offsets = [0, 0], sizes = [16, 32], strides = [1, 1]} : vector<32x32xf32> to vector<16x32xf32>
    %49 = vector.extract_strided_slice %46 {offsets = [0, 0], sizes = [8, 16], strides = [1, 1]} : vector<64x16xf32> to vector<8x16xf32>
    %50 = vector.extract_strided_slice %48 {offsets = [0, 0], sizes = [16, 8], strides = [1, 1]} : vector<16x32xf32> to vector<16x8xf32>
    %cst_23 = arith.constant dense<0.000000e+00> : vector<8x8xf32>
    %51 = tpu.matmul %49, %50, %cst_23 {dimension_numbers = #tpu.dot_dimension_numbers<[1], [0], [0], [1], [0, 0, 1, 1], [], []>} : vector<8x16xf32>, vector<16x8xf32>, vector<8x8xf32> -> vector<8x8xf32>
    %52 = vector.extract_strided_slice %5 {offsets = [0, 0], sizes = [8, 32], strides = [1, 1]} : vector<32x32xf32> to vector<8x32xf32>
    %cst_24 = arith.constant dense<0.000000e+00> : vector<8x32xf32>
    %53 = tpu.matmul %51, %52, %cst_24 {dimension_numbers = #tpu.dot_dimension_numbers<[1], [0], [0], [1], [0, 0, 1, 1], [], []>} : vector<8x8xf32>, vector<8x32xf32>, vector<8x32xf32> -> vector<8x32xf32>
    %54 = vector.extract_strided_slice %46 {offsets = [8, 0], sizes = [8, 16], strides = [1, 1]} : vector<64x16xf32> to vector<8x16xf32>
    %55 = vector.extract_strided_slice %48 {offsets = [0, 8], sizes = [16, 8], strides = [1, 1]} : vector<16x32xf32> to vector<16x8xf32>
    %cst_25 = arith.constant dense<0.000000e+00> : vector<8x8xf32>
    %56 = tpu.matmul %54, %55, %cst_25 {dimension_numbers = #tpu.dot_dimension_numbers<[1], [0], [0], [1], [0, 0, 1, 1], [], []>} : vector<8x16xf32>, vector<16x8xf32>, vector<8x8xf32> -> vector<8x8xf32>
    %57 = vector.extract_strided_slice %5 {offsets = [8, 0], sizes = [8, 32], strides = [1, 1]} : vector<32x32xf32> to vector<8x32xf32>
    %cst_26 = arith.constant dense<0.000000e+00> : vector<8x32xf32>
    %58 = tpu.matmul %56, %57, %cst_26 {dimension_numbers = #tpu.dot_dimension_numbers<[1], [0], [0], [1], [0, 0, 1, 1], [], []>} : vector<8x8xf32>, vector<8x32xf32>, vector<8x32xf32> -> vector<8x32xf32>
    %59 = arith.addf %53, %58 : vector<8x32xf32>
    %60 = vector.extract_strided_slice %46 {offsets = [16, 0], sizes = [8, 16], strides = [1, 1]} : vector<64x16xf32> to vector<8x16xf32>
    %61 = vector.extract_strided_slice %48 {offsets = [0, 16], sizes = [16, 8], strides = [1, 1]} : vector<16x32xf32> to vector<16x8xf32>
    %cst_27 = arith.constant dense<0.000000e+00> : vector<8x8xf32>
    %62 = tpu.matmul %60, %61, %cst_27 {dimension_numbers = #tpu.dot_dimension_numbers<[1], [0], [0], [1], [0, 0, 1, 1], [], []>} : vector<8x16xf32>, vector<16x8xf32>, vector<8x8xf32> -> vector<8x8xf32>
    %63 = vector.extract_strided_slice %5 {offsets = [16, 0], sizes = [8, 32], strides = [1, 1]} : vector<32x32xf32> to vector<8x32xf32>
    %cst_28 = arith.constant dense<0.000000e+00> : vector<8x32xf32>
    %64 = tpu.matmul %62, %63, %cst_28 {dimension_numbers = #tpu.dot_dimension_numbers<[1], [0], [0], [1], [0, 0, 1, 1], [], []>} : vector<8x8xf32>, vector<8x32xf32>, vector<8x32xf32> -> vector<8x32xf32>
    %65 = arith.addf %59, %64 : vector<8x32xf32>
    %66 = vector.extract_strided_slice %46 {offsets = [24, 0], sizes = [8, 16], strides = [1, 1]} : vector<64x16xf32> to vector<8x16xf32>
    %67 = vector.extract_strided_slice %48 {offsets = [0, 24], sizes = [16, 8], strides = [1, 1]} : vector<16x32xf32> to vector<16x8xf32>
    %cst_29 = arith.constant dense<0.000000e+00> : vector<8x8xf32>
    %68 = tpu.matmul %66, %67, %cst_29 {dimension_numbers = #tpu.dot_dimension_numbers<[1], [0], [0], [1], [0, 0, 1, 1], [], []>} : vector<8x16xf32>, vector<16x8xf32>, vector<8x8xf32> -> vector<8x8xf32>
    %69 = vector.extract_strided_slice %5 {offsets = [24, 0], sizes = [8, 32], strides = [1, 1]} : vector<32x32xf32> to vector<8x32xf32>
    %cst_30 = arith.constant dense<0.000000e+00> : vector<8x32xf32>
    %70 = tpu.matmul %68, %69, %cst_30 {dimension_numbers = #tpu.dot_dimension_numbers<[1], [0], [0], [1], [0, 0, 1, 1], [], []>} : vector<8x8xf32>, vector<8x32xf32>, vector<8x32xf32> -> vector<8x32xf32>
    %71 = arith.addf %65, %70 : vector<8x32xf32>
    %72 = vector.broadcast %47 : vector<1x32xf32> to vector<8x32xf32>
    %73 = arith.addf %71, %72 : vector<8x32xf32>
    %c0_31 = arith.constant 0 : index
    %c0_32 = arith.constant 0 : index
    %74 = vector.load %arg4[%c0_31, %c0_32] : memref<16x32xf32, #tpu.memory_space<vmem>>, vector<8x32xf32>
    tpu.vector_store %arg4[%c0_31, %c0_32], %73 {strides = array<i32>} : memref<16x32xf32, #tpu.memory_space<vmem>>, vector<8x32xf32>,
    %75 = vector.extract_strided_slice %8 {offsets = [16, 0], sizes = [16, 32], strides = [1, 1]} : vector<32x32xf32> to vector<16x32xf32>
    %76 = vector.extract_strided_slice %46 {offsets = [32, 0], sizes = [8, 16], strides = [1, 1]} : vector<64x16xf32> to vector<8x16xf32>
    %77 = vector.extract_strided_slice %75 {offsets = [0, 0], sizes = [16, 8], strides = [1, 1]} : vector<16x32xf32> to vector<16x8xf32>
    %cst_33 = arith.constant dense<0.000000e+00> : vector<8x8xf32>
    %78 = tpu.matmul %76, %77, %cst_33 {dimension_numbers = #tpu.dot_dimension_numbers<[1], [0], [0], [1], [0, 0, 1, 1], [], []>} : vector<8x16xf32>, vector<16x8xf32>, vector<8x8xf32> -> vector<8x8xf32>
    %79 = vector.extract_strided_slice %5 {offsets = [0, 0], sizes = [8, 32], strides = [1, 1]} : vector<32x32xf32> to vector<8x32xf32>
    %cst_34 = arith.constant dense<0.000000e+00> : vector<8x32xf32>
    %80 = tpu.matmul %78, %79, %cst_34 {dimension_numbers = #tpu.dot_dimension_numbers<[1], [0], [0], [1], [0, 0, 1, 1], [], []>} : vector<8x8xf32>, vector<8x32xf32>, vector<8x32xf32> -> vector<8x32xf32>
    %81 = vector.extract_strided_slice %46 {offsets = [40, 0], sizes = [8, 16], strides = [1, 1]} : vector<64x16xf32> to vector<8x16xf32>
    %82 = vector.extract_strided_slice %75 {offsets = [0, 8], sizes = [16, 8], strides = [1, 1]} : vector<16x32xf32> to vector<16x8xf32>
    %cst_35 = arith.constant dense<0.000000e+00> : vector<8x8xf32>
    %83 = tpu.matmul %81, %82, %cst_35 {dimension_numbers = #tpu.dot_dimension_numbers<[1], [0], [0], [1], [0, 0, 1, 1], [], []>} : vector<8x16xf32>, vector<16x8xf32>, vector<8x8xf32> -> vector<8x8xf32>
    %84 = vector.extract_strided_slice %5 {offsets = [8, 0], sizes = [8, 32], strides = [1, 1]} : vector<32x32xf32> to vector<8x32xf32>
    %cst_36 = arith.constant dense<0.000000e+00> : vector<8x32xf32>
    %85 = tpu.matmul %83, %84, %cst_36 {dimension_numbers = #tpu.dot_dimension_numbers<[1], [0], [0], [1], [0, 0, 1, 1], [], []>} : vector<8x8xf32>, vector<8x32xf32>, vector<8x32xf32> -> vector<8x32xf32>
    %86 = arith.addf %80, %85 : vector<8x32xf32>
    %87 = vector.extract_strided_slice %46 {offsets = [48, 0], sizes = [8, 16], strides = [1, 1]} : vector<64x16xf32> to vector<8x16xf32>
    %88 = vector.extract_strided_slice %75 {offsets = [0, 16], sizes = [16, 8], strides = [1, 1]} : vector<16x32xf32> to vector<16x8xf32>
    %cst_37 = arith.constant dense<0.000000e+00> : vector<8x8xf32>
    %89 = tpu.matmul %87, %88, %cst_37 {dimension_numbers = #tpu.dot_dimension_numbers<[1], [0], [0], [1], [0, 0, 1, 1], [], []>} : vector<8x16xf32>, vector<16x8xf32>, vector<8x8xf32> -> vector<8x8xf32>
    %90 = vector.extract_strided_slice %5 {offsets = [16, 0], sizes = [8, 32], strides = [1, 1]} : vector<32x32xf32> to vector<8x32xf32>
    %cst_38 = arith.constant dense<0.000000e+00> : vector<8x32xf32>
    %91 = tpu.matmul %89, %90, %cst_38 {dimension_numbers = #tpu.dot_dimension_numbers<[1], [0], [0], [1], [0, 0, 1, 1], [], []>} : vector<8x8xf32>, vector<8x32xf32>, vector<8x32xf32> -> vector<8x32xf32>
    %92 = arith.addf %86, %91 : vector<8x32xf32>
    %93 = vector.extract_strided_slice %46 {offsets = [56, 0], sizes = [8, 16], strides = [1, 1]} : vector<64x16xf32> to vector<8x16xf32>
    %94 = vector.extract_strided_slice %75 {offsets = [0, 24], sizes = [16, 8], strides = [1, 1]} : vector<16x32xf32> to vector<16x8xf32>
    %cst_39 = arith.constant dense<0.000000e+00> : vector<8x8xf32>
    %95 = tpu.matmul %93, %94, %cst_39 {dimension_numbers = #tpu.dot_dimension_numbers<[1], [0], [0], [1], [0, 0, 1, 1], [], []>} : vector<8x16xf32>, vector<16x8xf32>, vector<8x8xf32> -> vector<8x8xf32>
    %96 = vector.extract_strided_slice %5 {offsets = [24, 0], sizes = [8, 32], strides = [1, 1]} : vector<32x32xf32> to vector<8x32xf32>
    %cst_40 = arith.constant dense<0.000000e+00> : vector<8x32xf32>
    %97 = tpu.matmul %95, %96, %cst_40 {dimension_numbers = #tpu.dot_dimension_numbers<[1], [0], [0], [1], [0, 0, 1, 1], [], []>} : vector<8x8xf32>, vector<8x32xf32>, vector<8x32xf32> -> vector<8x32xf32>
    %98 = arith.addf %92, %97 : vector<8x32xf32>
    %99 = vector.broadcast %47 : vector<1x32xf32> to vector<8x32xf32>
    %100 = arith.addf %98, %99 : vector<8x32xf32>
    %c8 = arith.constant 8 : index
    %c0_41 = arith.constant 0 : index
    %101 = vector.load %arg4[%c8, %c0_41] : memref<16x32xf32, #tpu.memory_space<vmem>>, vector<8x32xf32>
    tpu.vector_store %arg4[%c8, %c0_41], %100 {strides = array<i32>} : memref<16x32xf32, #tpu.memory_space<vmem>>, vector<8x32xf32>,
    return
  }
}

</mosaic_0001>

<llo_original>
// kernel: tpu_custom_call.1
$region0: #{tpu_custom_call.1}
  #allocation0 [shape = 'u32[]', space=smem, size = 0x4, offset = 0x4, fixed_abs, tag = 'smem constant byte address 0x4 - core index']
  #allocation1 [shape = 'u32[144,128]{1,0:T(1,128)}', space=vmem, size = 0x12000, scoped, tag = 'internal scratch']
  %s0 = inlined_call_operand.vmem [shape: f32[16,32], index: 0, kind: input, shape index: {}]
  %s1 = inlined_call_operand.vmem [shape: f32[32,32], index: 1, kind: input, shape index: {}]
  %s2 = inlined_call_operand.vmem [shape: f32[128,32], index: 2, kind: input, shape index: {}]
  %s3 = inlined_call_operand.vmem [shape: f32[1,32], index: 3, kind: input, shape index: {}]
  %s4 = inlined_call_operand.hbm [shape: f32[16,32], index: 4, kind: output, shape index: {}]
  %s5 = sld [smem:[#allocation0]]
  $region26: #{tpu_custom_call.1} parent=0
    _
  %s7 = ssub.s32 1, %s5
  %s8 = scalar_select 0, %s7, %s5
  $region1: #{tpu_custom_call.1} parent=0
    #allocation2 [shape = 'u8[8192]{0}', space=vmem, size = 0x2000, scoped, tag = 'output window, operand 0, single buffered']
    #allocation3 [shape = 's32[1]{0}', space=sflag, size = 0x4, scoped, tag = 'scoped memory for tpu_custom_call.1']
    %9 = vsyncpa [#allocation3], 0
    // Predicated region
    $region2: #{tpu_custom_call.1} parent=1 // pred_check
      _
    $region3: #{tpu_custom_call.1} parent=1 // pred_check_branch
      %11 = sbr.rel (0) target = $region5
    $region4: #{tpu_custom_call.1} parent=1 // pred_region
      _
    $region5: #{tpu_custom_call.1} parent=1 // pred_fallthru
      _
    // Predicated region
    $region6: #{tpu_custom_call.1} parent=1 // pred_check
      _
    $region7: #{tpu_custom_call.1} parent=1 // pred_check_branch
      %13 = sbr.rel (0) target = $region9
    $region8: #{tpu_custom_call.1} parent=1 // pred_region
      _
    $region9: #{tpu_custom_call.1} parent=1 // pred_fallthru
      _
    // Predicated region
    $region10: #{tpu_custom_call.1} parent=1 // pred_check
      _
    $region11: #{tpu_custom_call.1} parent=1 // pred_check_branch
      %15 = sbr.rel (0) target = $region13
    $region12: #{tpu_custom_call.1} parent=1 // pred_region
      _
    $region13: #{tpu_custom_call.1} parent=1 // pred_fallthru
      _
    // Predicated region
    $region14: #{tpu_custom_call.1} parent=1 // pred_check
      _
    $region15: #{tpu_custom_call.1} parent=1 // pred_check_branch
      %17 = sbr.rel (0) target = $region17
    $region16: #{tpu_custom_call.1} parent=1 // pred_region
      _
    $region17: #{tpu_custom_call.1} parent=1 // pred_fallthru
      _
    %v18 = vld [vmem:[%s0] sm:$0xff]
    %v19 = vld [vmem:[%s0 + $0x8] sm:$0xff]
    %v20 = vld [vmem:[%s1] sm:$0xff]
    %v21 = vld [vmem:[%s1 + $0x8] sm:$0xff]
    %v22 = vld [vmem:[%s1 + $0x10] sm:$0xff]
    %v23 = vld [vmem:[%s1 + $0x18] sm:$0xff]
    %v24 = vld [vmem:[%s2] sm:$0xff]
    %v25 = vld [vmem:[%s2 + $0x8] sm:$0xff]
    %v26 = vld [vmem:[%s2 + $0x10] sm:$0xff]
    %v27 = vld [vmem:[%s2 + $0x18] sm:$0xff]
    %v28 = vld [vmem:[%s2 + $0x20] sm:$0xff]
    %v29 = vld [vmem:[%s2 + $0x28] sm:$0xff]
    %v30 = vld [vmem:[%s2 + $0x30] sm:$0xff]
    %v31 = vld [vmem:[%s2 + $0x38] sm:$0xff]
    %v32 = vld [vmem:[%s2 + $0x40] sm:$0xff]
    %v33 = vld [vmem:[%s2 + $0x48] sm:$0xff]
    %v34 = vld [vmem:[%s2 + $0x50] sm:$0xff]
    %v35 = vld [vmem:[%s2 + $0x58] sm:$0xff]
    %v36 = vld [vmem:[%s2 + $0x60] sm:$0xff]
    %v37 = vld [vmem:[%s2 + $0x68] sm:$0xff]
    %v38 = vld [vmem:[%s2 + $0x70] sm:$0xff]
    %v39 = vld [vmem:[%s2 + $0x78] sm:$0xff]
    %vm40 = vcmask 261120
    %v42 = vsel %vm40, %v18, 0
    %v45 = vsel %vm40, %v19, 0
    %47 = vmatprep.subr.mxu0 0.0
    %48 = vmatpush1.msra.mxu0 0.0
    %49 = vmatprep.subr.mxu0 0.0
    %50 = vmatpush1.msra.mxu0 0.0
    %51 = vmatprep.subr.mxu0 0.0
    %52 = vmatpush1.msra.mxu0 0.0
    %53 = vmatprep.subr.mxu0 0.0
    %54 = vmatpush1.msra.mxu0 0.0
    %55 = vmatprep.subr.mxu0 0.0
    %56 = vmatpush1.msra.mxu0 0.0
    %57 = vmatprep.subr.mxu0 0.0
    %58 = vmatpush1.msra.mxu0 0.0
    %59 = vmatprep.subr.mxu0 0.0
    %60 = vmatpush1.msra.mxu0 0.0
    %61 = vmatprep.subr.mxu0 0.0
    %62 = vmatpush1.msra.mxu0 0.0
    %63 = vmatprep.subr.mxu0 0.0
    %64 = vmatpush1.msra.mxu0 0.0
    %65 = vmatprep.subr.mxu0 0.0
    %66 = vmatpush1.msra.mxu0 0.0
    %67 = vmatprep.subr.mxu0 0.0
    %68 = vmatpush1.msra.mxu0 0.0
    %69 = vmatprep.subr.mxu0 0.0
    %70 = vmatpush1.msra.mxu0 0.0
    %71 = vmatprep.subr.mxu0 0.0
    %72 = vmatpush1.msra.mxu0 %v27
    %73 = vmatprep.subr.mxu0 0.0
    %74 = vmatpush1.msra.mxu0 %v26
    %75 = vmatprep.subr.mxu0 0.0
    %76 = vmatpush1.msra.mxu0 %v25
    %77 = vmatprep.subr.mxu0 0.0
    %78 = vmatpush1.msra.mxu0 %v24
    %79 = vmatprep.subr.mxu0 0.0
    %80 = vmatpush2.msra.mxu0 0.0
    %81 = vmatprep.subr.mxu0 0.0
    %82 = vmatpush2.msra.mxu0 0.0
    %83 = vmatprep.subr.mxu0 0.0
    %84 = vmatpush2.msra.mxu0 0.0
    %85 = vmatprep.subr.mxu0 0.0
    %86 = vmatpush2.msra.mxu0 0.0
    %87 = vmatprep.subr.mxu0 0.0
    %88 = vmatpush2.msra.mxu0 0.0
    %89 = vmatprep.subr.mxu0 0.0
    %90 = vmatpush2.msra.mxu0 0.0
    %91 = vmatprep.subr.mxu0 0.0
    %92 = vmatpush2.msra.mxu0 0.0
    %93 = vmatprep.subr.mxu0 0.0
    %94 = vmatpush2.msra.mxu0 0.0
    %95 = vmatprep.subr.mxu0 0.0
    %96 = vmatpush2.msra.mxu0 0.0
    %97 = vmatprep.subr.mxu0 0.0
    %98 = vmatpush2.msra.mxu0 0.0
    %99 = vmatprep.subr.mxu0 0.0
    %100 = vmatpush2.msra.mxu0 0.0
    %101 = vmatprep.subr.mxu0 0.0
    %102 = vmatpush2.msra.mxu0 0.0
    %103 = vmatprep.subr.mxu0 0.0
    %104 = vmatpush2.msra.mxu0 0.0
    %105 = vmatprep.subr.mxu0 0.0
    %106 = vmatpush2.msra.mxu0 0.0
    %107 = vmatprep.subr.mxu0 0.0
    %108 = vmatpush2.msra.mxu0 0.0
    %109 = vmatprep.subr.mxu0 0.0
    %110 = vmatpush2.msra.mxu0 0.0
    %111 = vmatprep.mubr.f32.mxu0 0.0
    %112 = vmatmul.mubr.f32.gmra.mxu0 %v42
    %v113 = vpop.f32.mrf.mxu0
    %v114 = vadd.f32 0.0, %v113
    %v115 = vpop.f32.mrf.mxu0
    %116 = vmatprep.mubr.f32.mxu0 0.0
    %117 = vmatmul.mubr.f32.gmra.mxu0 %v45
    %v118 = vpop.f32.mrf.mxu0
    %v119 = vadd.f32 0.0, %v118
    %v120 = vpop.f32.mrf.mxu0
    %121 = vdwg.mxu0
    %v123 = vsel %vm40, %v20, 0
    %v126 = vsel %vm40, %v21, 0
    %v129 = vsel %vm40, %v22, 0
    %v132 = vsel %vm40, %v23, 0
    %134 = vmatprep.subr.mxu0 0.0
    %135 = vmatpush1.msra.mxu0 0.0
    %136 = vmatprep.subr.mxu0 0.0
    %137 = vmatpush1.msra.mxu0 0.0
    %138 = vmatprep.subr.mxu0 0.0
    %139 = vmatpush1.msra.mxu0 0.0
    %140 = vmatprep.subr.mxu0 0.0
    %141 = vmatpush1.msra.mxu0 0.0
    %142 = vmatprep.subr.mxu0 0.0
    %143 = vmatpush1.msra.mxu0 0.0
    %144 = vmatprep.subr.mxu0 0.0
    %145 = vmatpush1.msra.mxu0 0.0
    %146 = vmatprep.subr.mxu0 0.0
    %147 = vmatpush1.msra.mxu0 0.0
    %148 = vmatprep.subr.mxu0 0.0
    %149 = vmatpush1.msra.mxu0 0.0
    %150 = vmatprep.subr.mxu0 0.0
    %151 = vmatpush1.msra.mxu0 0.0
    %152 = vmatprep.subr.mxu0 0.0
    %153 = vmatpush1.msra.mxu0 0.0
    %154 = vmatprep.subr.mxu0 0.0
    %155 = vmatpush1.msra.mxu0 0.0
    %156 = vmatprep.subr.mxu0 0.0
    %157 = vmatpush1.msra.mxu0 0.0
    %158 = vmatprep.subr.mxu0 0.0
    %159 = vmatpush1.msra.mxu0 %v31
    %160 = vmatprep.subr.mxu0 0.0
    %161 = vmatpush1.msra.mxu0 %v30
    %162 = vmatprep.subr.mxu0 0.0
    %163 = vmatpush1.msra.mxu0 %v29
    %164 = vmatprep.subr.mxu0 0.0
    %165 = vmatpush1.msra.mxu0 %v28
    %166 = vmatprep.subr.mxu0 0.0
    %167 = vmatpush2.msra.mxu0 0.0
    %168 = vmatprep.subr.mxu0 0.0
    %169 = vmatpush2.msra.mxu0 0.0
    %170 = vmatprep.subr.mxu0 0.0
    %171 = vmatpush2.msra.mxu0 0.0
    %172 = vmatprep.subr.mxu0 0.0
    %173 = vmatpush2.msra.mxu0 0.0
    %174 = vmatprep.subr.mxu0 0.0
    %175 = vmatpush2.msra.mxu0 0.0
    %176 = vmatprep.subr.mxu0 0.0
    %177 = vmatpush2.msra.mxu0 0.0
    %178 = vmatprep.subr.mxu0 0.0
    %179 = vmatpush2.msra.mxu0 0.0
    %180 = vmatprep.subr.mxu0 0.0
    %181 = vmatpush2.msra.mxu0 0.0
    %182 = vmatprep.subr.mxu0 0.0
    %183 = vmatpush2.msra.mxu0 0.0
    %184 = vmatprep.subr.mxu0 0.0
    %185 = vmatpush2.msra.mxu0 0.0
    %186 = vmatprep.subr.mxu0 0.0
    %187 = vmatpush2.msra.mxu0 0.0
    %188 = vmatprep.subr.mxu0 0.0
    %189 = vmatpush2.msra.mxu0 0.0
    %190 = vmatprep.subr.mxu0 0.0
    %191 = vmatpush2.msra.mxu0 0.0
    %192 = vmatprep.subr.mxu0 0.0
    %193 = vmatpush2.msra.mxu0 0.0
    %194 = vmatprep.subr.mxu0 0.0
    %195 = vmatpush2.msra.mxu0 0.0
    %196 = vmatprep.subr.mxu0 0.0
    %197 = vmatpush2.msra.mxu0 0.0
    %198 = vmatprep.mubr.f32.mxu0 0.0
    %199 = vmatmul.mubr.f32.gmra.mxu0 %v123
    %v200 = vpop.f32.mrf.mxu0
    %v201 = vadd.f32 0.0, %v200
    %v202 = vpop.f32.mrf.mxu0
    %203 = vmatprep.mubr.f32.mxu0 0.0
    %204 = vmatmul.mubr.f32.gmra.mxu0 %v126
    %v205 = vpop.f32.mrf.mxu0
    %v206 = vadd.f32 0.0, %v205
    %v207 = vpop.f32.mrf.mxu0
    %208 = vmatprep.mubr.f32.mxu0 0.0
    %209 = vmatmul.mubr.f32.gmra.mxu0 %v129
    %v210 = vpop.f32.mrf.mxu0
    %v211 = vadd.f32 0.0, %v210
    %v212 = vpop.f32.mrf.mxu0
    %213 = vmatprep.mubr.f32.mxu0 0.0
    %214 = vmatmul.mubr.f32.gmra.mxu0 %v132
    %v215 = vpop.f32.mrf.mxu0
    %v216 = vadd.f32 0.0, %v215
    %v217 = vpop.f32.mrf.mxu0
    %218 = vdwg.mxu0
    %219 = vmatprep.subr.mxu0 0.0
    %220 = vmatpush1.msra.mxu0 0.0
    %221 = vmatprep.subr.mxu0 0.0
    %222 = vmatpush1.msra.mxu0 0.0
    %223 = vmatprep.subr.mxu0 0.0
    %224 = vmatpush1.msra.mxu0 0.0
    %225 = vmatprep.subr.mxu0 0.0
    %226 = vmatpush1.msra.mxu0 0.0
    %227 = vmatprep.subr.mxu0 0.0
    %228 = vmatpush1.msra.mxu0 0.0
    %229 = vmatprep.subr.mxu0 0.0
    %230 = vmatpush1.msra.mxu0 0.0
    %231 = vmatprep.subr.mxu0 0.0
    %232 = vmatpush1.msra.mxu0 0.0
    %233 = vmatprep.subr.mxu0 0.0
    %234 = vmatpush1.msra.mxu0 0.0
    %235 = vmatprep.subr.mxu0 0.0
    %236 = vmatpush1.msra.mxu0 0.0
    %237 = vmatprep.subr.mxu0 0.0
    %238 = vmatpush1.msra.mxu0 0.0
    %239 = vmatprep.subr.mxu0 0.0
    %240 = vmatpush1.msra.mxu0 0.0
    %241 = vmatprep.subr.mxu0 0.0
    %242 = vmatpush1.msra.mxu0 0.0
    %243 = vmatprep.subr.mxu0 0.0
    %244 = vmatpush1.msra.mxu0 %v35
    %245 = vmatprep.subr.mxu0 0.0
    %246 = vmatpush1.msra.mxu0 %v34
    %247 = vmatprep.subr.mxu0 0.0
    %248 = vmatpush1.msra.mxu0 %v33
    %249 = vmatprep.subr.mxu0 0.0
    %250 = vmatpush1.msra.mxu0 %v32
    %251 = vmatprep.subr.mxu0 0.0
    %252 = vmatpush2.msra.mxu0 0.0
    %253 = vmatprep.subr.mxu0 0.0
    %254 = vmatpush2.msra.mxu0 0.0
    %255 = vmatprep.subr.mxu0 0.0
    %256 = vmatpush2.msra.mxu0 0.0
    %257 = vmatprep.subr.mxu0 0.0
    %258 = vmatpush2.msra.mxu0 0.0
    %259 = vmatprep.subr.mxu0 0.0
    %260 = vmatpush2.msra.mxu0 0.0
    %261 = vmatprep.subr.mxu0 0.0
    %262 = vmatpush2.msra.mxu0 0.0
    %263 = vmatprep.subr.mxu0 0.0
    %264 = vmatpush2.msra.mxu0 0.0
    %265 = vmatprep.subr.mxu0 0.0
    %266 = vmatpush2.msra.mxu0 0.0
    %267 = vmatprep.subr.mxu0 0.0
    %268 = vmatpush2.msra.mxu0 0.0
    %269 = vmatprep.subr.mxu0 0.0
    %270 = vmatpush2.msra.mxu0 0.0
    %271 = vmatprep.subr.mxu0 0.0
    %272 = vmatpush2.msra.mxu0 0.0
    %273 = vmatprep.subr.mxu0 0.0
    %274 = vmatpush2.msra.mxu0 0.0
    %275 = vmatprep.subr.mxu0 0.0
    %276 = vmatpush2.msra.mxu0 0.0
    %277 = vmatprep.subr.mxu0 0.0
    %278 = vmatpush2.msra.mxu0 0.0
    %279 = vmatprep.subr.mxu0 0.0
    %280 = vmatpush2.msra.mxu0 0.0
    %281 = vmatprep.subr.mxu0 0.0
    %282 = vmatpush2.msra.mxu0 0.0
    %283 = vmatprep.mubr.f32.mxu0 0.0
    %284 = vmatmul.mubr.f32.gmra.mxu0 %v123
    %v285 = vpop.f32.mrf.mxu0
    %v286 = vadd.f32 0.0, %v285
    %v287 = vpop.f32.mrf.mxu0
    %288 = vmatprep.mubr.f32.mxu0 0.0
    %289 = vmatmul.mubr.f32.gmra.mxu0 %v126
    %v290 = vpop.f32.mrf.mxu0
    %v291 = vadd.f32 0.0, %v290
    %v292 = vpop.f32.mrf.mxu0
    %293 = vmatprep.mubr.f32.mxu0 0.0
    %294 = vmatmul.mubr.f32.gmra.mxu0 %v129
    %v295 = vpop.f32.mrf.mxu0
    %v296 = vadd.f32 0.0, %v295
    %v297 = vpop.f32.mrf.mxu0
    %298 = vmatprep.mubr.f32.mxu0 0.0
    %299 = vmatmul.mubr.f32.gmra.mxu0 %v132
    %v300 = vpop.f32.mrf.mxu0
    %v301 = vadd.f32 0.0, %v300
    %v302 = vpop.f32.mrf.mxu0
    %303 = vdwg.mxu0
    %vm304 = vcmask 64512
    %v306 = vsel %vm304, %v114, 0
    %v309 = vsel %vm304, %v201, 0
    %v312 = vsel %vm304, %v206, 0
    %314 = vmatprep.subr.mxu0 0.0
    %315 = vmatpush1.xpose.msra.mxu0 0.0
    %316 = vmatprep.subr.mxu0 0.0
    %317 = vmatpush1.xpose.msra.mxu0 0.0
    %318 = vmatprep.subr.mxu0 0.0
    %319 = vmatpush1.xpose.msra.mxu0 0.0
    %320 = vmatprep.subr.mxu0 0.0
    %321 = vmatpush1.xpose.msra.mxu0 0.0
    %322 = vmatprep.subr.mxu0 0.0
    %323 = vmatpush1.xpose.msra.mxu0 0.0
    %324 = vmatprep.subr.mxu0 0.0
    %325 = vmatpush1.xpose.msra.mxu0 0.0
    %326 = vmatprep.subr.mxu0 0.0
    %327 = vmatpush1.xpose.msra.mxu0 0.0
    %328 = vmatprep.subr.mxu0 0.0
    %329 = vmatpush1.xpose.msra.mxu0 0.0
    %330 = vmatprep.subr.mxu0 0.0
    %331 = vmatpush1.xpose.msra.mxu0 0.0
    %332 = vmatprep.subr.mxu0 0.0
    %333 = vmatpush1.xpose.msra.mxu0 0.0
    %334 = vmatprep.subr.mxu0 0.0
    %335 = vmatpush1.xpose.msra.mxu0 0.0
    %336 = vmatprep.subr.mxu0 0.0
    %337 = vmatpush1.xpose.msra.mxu0 0.0
    %338 = vmatprep.subr.mxu0 0.0
    %339 = vmatpush1.xpose.msra.mxu0 0.0
    %340 = vmatprep.subr.mxu0 0.0
    %341 = vmatpush1.xpose.msra.mxu0 0.0
    %342 = vmatprep.subr.mxu0 0.0
    %343 = vmatpush1.xpose.msra.mxu0 %v312
    %344 = vmatprep.subr.mxu0 0.0
    %345 = vmatpush1.xpose.msra.mxu0 %v309
    %346 = vmatprep.subr.mxu0 0.0
    %347 = vmatpush2.xpose.msra.mxu0 0.0
    %348 = vmatprep.subr.mxu0 0.0
    %349 = vmatpush2.xpose.msra.mxu0 0.0
    %350 = vmatprep.subr.mxu0 0.0
    %351 = vmatpush2.xpose.msra.mxu0 0.0
    %352 = vmatprep.subr.mxu0 0.0
    %353 = vmatpush2.xpose.msra.mxu0 0.0
    %354 = vmatprep.subr.mxu0 0.0
    %355 = vmatpush2.xpose.msra.mxu0 0.0
    %356 = vmatprep.subr.mxu0 0.0
    %357 = vmatpush2.xpose.msra.mxu0 0.0
    %358 = vmatprep.subr.mxu0 0.0
    %359 = vmatpush2.xpose.msra.mxu0 0.0
    %360 = vmatprep.subr.mxu0 0.0
    %361 = vmatpush2.xpose.msra.mxu0 0.0
    %362 = vmatprep.subr.mxu0 0.0
    %363 = vmatpush2.xpose.msra.mxu0 0.0
    %364 = vmatprep.subr.mxu0 0.0
    %365 = vmatpush2.xpose.msra.mxu0 0.0
    %366 = vmatprep.subr.mxu0 0.0
    %367 = vmatpush2.xpose.msra.mxu0 0.0
    %368 = vmatprep.subr.mxu0 0.0
    %369 = vmatpush2.xpose.msra.mxu0 0.0
    %370 = vmatprep.subr.mxu0 0.0
    %371 = vmatpush2.xpose.msra.mxu0 0.0
    %372 = vmatprep.subr.mxu0 0.0
    %373 = vmatpush2.xpose.msra.mxu0 0.0
    %374 = vmatprep.subr.mxu0 0.0
    %375 = vmatpush2.xpose.msra.mxu0 0.0
    %376 = vmatprep.subr.mxu0 0.0
    %377 = vmatpush2.xpose.msra.mxu0 0.0
    %378 = vmatprep.mubr.f32.mxu0 0.0
    %379 = vmatmul.mubr.f32.gmra.mxu0 %v306
    %v380 = vpop.f32.mrf.mxu0
    %v381 = vadd.f32 0.0, %v380
    %v382 = vpop.f32.mrf.mxu0
    %383 = vdwg.mxu0
    %384 = vrot.lane.b32.xlu0 %v114, 120
    %v385 = vpop.permute.xlu0 %384
    %386 = vrot.lane.b32.xlu0 %v201, 120
    %v387 = vpop.permute.xlu0 %386
    %388 = vrot.lane.b32.xlu0 %v206, 120
    %v389 = vpop.permute.xlu0 %388
    %v390 = vsel %vm304, %v385, 0
    %v392 = vsel %vm304, %v387, 0
    %v394 = vsel %vm304, %v389, 0
    %396 = vmatprep.subr.mxu0 0.0
    %397 = vmatpush1.xpose.msra.mxu0 0.0
    %398 = vmatprep.subr.mxu0 0.0
    %399 = vmatpush1.xpose.msra.mxu0 0.0
    %400 = vmatprep.subr.mxu0 0.0
    %401 = vmatpush1.xpose.msra.mxu0 0.0
    %402 = vmatprep.subr.mxu0 0.0
    %403 = vmatpush1.xpose.msra.mxu0 0.0
    %404 = vmatprep.subr.mxu0 0.0
    %405 = vmatpush1.xpose.msra.mxu0 0.0
    %406 = vmatprep.subr.mxu0 0.0
    %407 = vmatpush1.xpose.msra.mxu0 0.0
    %408 = vmatprep.subr.mxu0 0.0
    %409 = vmatpush1.xpose.msra.mxu0 0.0
    %410 = vmatprep.subr.mxu0 0.0
    %411 = vmatpush1.xpose.msra.mxu0 0.0
    %412 = vmatprep.subr.mxu0 0.0
    %413 = vmatpush1.xpose.msra.mxu0 0.0
    %414 = vmatprep.subr.mxu0 0.0
    %415 = vmatpush1.xpose.msra.mxu0 0.0
    %416 = vmatprep.subr.mxu0 0.0
    %417 = vmatpush1.xpose.msra.mxu0 0.0
    %418 = vmatprep.subr.mxu0 0.0
    %419 = vmatpush1.xpose.msra.mxu0 0.0
    %420 = vmatprep.subr.mxu0 0.0
    %421 = vmatpush1.xpose.msra.mxu0 0.0
    %422 = vmatprep.subr.mxu0 0.0
    %423 = vmatpush1.xpose.msra.mxu0 0.0
    %424 = vmatprep.subr.mxu0 0.0
    %425 = vmatpush1.xpose.msra.mxu0 %v394
    %426 = vmatprep.subr.mxu0 0.0
    %427 = vmatpush1.xpose.msra.mxu0 %v392
    %428 = vmatprep.subr.mxu0 0.0
    %429 = vmatpush2.xpose.msra.mxu0 0.0
    %430 = vmatprep.subr.mxu0 0.0
    %431 = vmatpush2.xpose.msra.mxu0 0.0
    %432 = vmatprep.subr.mxu0 0.0
    %433 = vmatpush2.xpose.msra.mxu0 0.0
    %434 = vmatprep.subr.mxu0 0.0
    %435 = vmatpush2.xpose.msra.mxu0 0.0
    %436 = vmatprep.subr.mxu0 0.0
    %437 = vmatpush2.xpose.msra.mxu0 0.0
    %438 = vmatprep.subr.mxu0 0.0
    %439 = vmatpush2.xpose.msra.mxu0 0.0
    %440 = vmatprep.subr.mxu0 0.0
    %441 = vmatpush2.xpose.msra.mxu0 0.0
    %442 = vmatprep.subr.mxu0 0.0
    %443 = vmatpush2.xpose.msra.mxu0 0.0
    %444 = vmatprep.subr.mxu0 0.0
    %445 = vmatpush2.xpose.msra.mxu0 0.0
    %446 = vmatprep.subr.mxu0 0.0
    %447 = vmatpush2.xpose.msra.mxu0 0.0
    %448 = vmatprep.subr.mxu0 0.0
    %449 = vmatpush2.xpose.msra.mxu0 0.0
    %450 = vmatprep.subr.mxu0 0.0
    %451 = vmatpush2.xpose.msra.mxu0 0.0
    %452 = vmatprep.subr.mxu0 0.0
    %453 = vmatpush2.xpose.msra.mxu0 0.0
    %454 = vmatprep.subr.mxu0 0.0
    %455 = vmatpush2.xpose.msra.mxu0 0.0
    %456 = vmatprep.subr.mxu0 0.0
    %457 = vmatpush2.xpose.msra.mxu0 0.0
    %458 = vmatprep.subr.mxu0 0.0
    %459 = vmatpush2.xpose.msra.mxu0 0.0
    %460 = vmatprep.mubr.f32.mxu0 0.0
    %461 = vmatmul.mubr.f32.gmra.mxu0 %v390
    %v462 = vpop.f32.mrf.mxu0
    %v463 = vadd.f32 0.0, %v462
    %v464 = vpop.f32.mrf.mxu0
    %465 = vdwg.mxu0
    %466 = vrot.lane.b32.xlu0 %v114, 112
    %v467 = vpop.permute.xlu0 %466
    %468 = vrot.lane.b32.xlu0 %v201, 112
    %v469 = vpop.permute.xlu0 %468
    %470 = vrot.lane.b32.xlu0 %v206, 112
    %v471 = vpop.permute.xlu0 %470
    %v472 = vsel %vm304, %v467, 0
    %v474 = vsel %vm304, %v469, 0
    %v476 = vsel %vm304, %v471, 0
    %478 = vmatprep.subr.mxu0 0.0
    %479 = vmatpush1.xpose.msra.mxu0 0.0
    %480 = vmatprep.subr.mxu0 0.0
    %481 = vmatpush1.xpose.msra.mxu0 0.0
    %482 = vmatprep.subr.mxu0 0.0
    %483 = vmatpush1.xpose.msra.mxu0 0.0
    %484 = vmatprep.subr.mxu0 0.0
    %485 = vmatpush1.xpose.msra.mxu0 0.0
    %486 = vmatprep.subr.mxu0 0.0
    %487 = vmatpush1.xpose.msra.mxu0 0.0
    %488 = vmatprep.subr.mxu0 0.0
    %489 = vmatpush1.xpose.msra.mxu0 0.0
    %490 = vmatprep.subr.mxu0 0.0
    %491 = vmatpush1.xpose.msra.mxu0 0.0
    %492 = vmatprep.subr.mxu0 0.0
    %493 = vmatpush1.xpose.msra.mxu0 0.0
    %494 = vmatprep.subr.mxu0 0.0
    %495 = vmatpush1.xpose.msra.mxu0 0.0
    %496 = vmatprep.subr.mxu0 0.0
    %497 = vmatpush1.xpose.msra.mxu0 0.0
    %498 = vmatprep.subr.mxu0 0.0
    %499 = vmatpush1.xpose.msra.mxu0 0.0
    %500 = vmatprep.subr.mxu0 0.0
    %501 = vmatpush1.xpose.msra.mxu0 0.0
    %502 = vmatprep.subr.mxu0 0.0
    %503 = vmatpush1.xpose.msra.mxu0 0.0
    %504 = vmatprep.subr.mxu0 0.0
    %505 = vmatpush1.xpose.msra.mxu0 0.0
    %506 = vmatprep.subr.mxu0 0.0
    %507 = vmatpush1.xpose.msra.mxu0 %v476
    %508 = vmatprep.subr.mxu0 0.0
    %509 = vmatpush1.xpose.msra.mxu0 %v474
    %510 = vmatprep.subr.mxu0 0.0
    %511 = vmatpush2.xpose.msra.mxu0 0.0
    %512 = vmatprep.subr.mxu0 0.0
    %513 = vmatpush2.xpose.msra.mxu0 0.0
    %514 = vmatprep.subr.mxu0 0.0
    %515 = vmatpush2.xpose.msra.mxu0 0.0
    %516 = vmatprep.subr.mxu0 0.0
    %517 = vmatpush2.xpose.msra.mxu0 0.0
    %518 = vmatprep.subr.mxu0 0.0
    %519 = vmatpush2.xpose.msra.mxu0 0.0
    %520 = vmatprep.subr.mxu0 0.0
    %521 = vmatpush2.xpose.msra.mxu0 0.0
    %522 = vmatprep.subr.mxu0 0.0
    %523 = vmatpush2.xpose.msra.mxu0 0.0
    %524 = vmatprep.subr.mxu0 0.0
    %525 = vmatpush2.xpose.msra.mxu0 0.0
    %526 = vmatprep.subr.mxu0 0.0
    %527 = vmatpush2.xpose.msra.mxu0 0.0
    %528 = vmatprep.subr.mxu0 0.0
    %529 = vmatpush2.xpose.msra.mxu0 0.0
    %530 = vmatprep.subr.mxu0 0.0
    %531 = vmatpush2.xpose.msra.mxu0 0.0
    %532 = vmatprep.subr.mxu0 0.0
    %533 = vmatpush2.xpose.msra.mxu0 0.0
    %534 = vmatprep.subr.mxu0 0.0
    %535 = vmatpush2.xpose.msra.mxu0 0.0
    %536 = vmatprep.subr.mxu0 0.0
    %537 = vmatpush2.xpose.msra.mxu0 0.0
    %538 = vmatprep.subr.mxu0 0.0
    %539 = vmatpush2.xpose.msra.mxu0 0.0
    %540 = vmatprep.subr.mxu0 0.0
    %541 = vmatpush2.xpose.msra.mxu0 0.0
    %542 = vmatprep.mubr.f32.mxu0 0.0
    %543 = vmatmul.mubr.f32.gmra.mxu0 %v472
    %v544 = vpop.f32.mrf.mxu0
    %v545 = vadd.f32 0.0, %v544
    %v546 = vpop.f32.mrf.mxu0
    %547 = vdwg.mxu0
    %548 = vrot.lane.b32.xlu0 %v114, 104
    %v549 = vpop.permute.xlu0 %548
    %550 = vrot.lane.b32.xlu0 %v201, 104
    %v551 = vpop.permute.xlu0 %550
    %552 = vrot.lane.b32.xlu0 %v206, 104
    %v553 = vpop.permute.xlu0 %552
    %v554 = vsel %vm304, %v549, 0
    %v556 = vsel %vm304, %v551, 0
    %v558 = vsel %vm304, %v553, 0
    %560 = vmatprep.subr.mxu0 0.0
    %561 = vmatpush1.xpose.msra.mxu0 0.0
    %562 = vmatprep.subr.mxu0 0.0
    %563 = vmatpush1.xpose.msra.mxu0 0.0
    %564 = vmatprep.subr.mxu0 0.0
    %565 = vmatpush1.xpose.msra.mxu0 0.0
    %566 = vmatprep.subr.mxu0 0.0
    %567 = vmatpush1.xpose.msra.mxu0 0.0
    %568 = vmatprep.subr.mxu0 0.0
    %569 = vmatpush1.xpose.msra.mxu0 0.0
    %570 = vmatprep.subr.mxu0 0.0
    %571 = vmatpush1.xpose.msra.mxu0 0.0
    %572 = vmatprep.subr.mxu0 0.0
    %573 = vmatpush1.xpose.msra.mxu0 0.0
    %574 = vmatprep.subr.mxu0 0.0
    %575 = vmatpush1.xpose.msra.mxu0 0.0
    %576 = vmatprep.subr.mxu0 0.0
    %577 = vmatpush1.xpose.msra.mxu0 0.0
    %578 = vmatprep.subr.mxu0 0.0
    %579 = vmatpush1.xpose.msra.mxu0 0.0
    %580 = vmatprep.subr.mxu0 0.0
    %581 = vmatpush1.xpose.msra.mxu0 0.0
    %582 = vmatprep.subr.mxu0 0.0
    %583 = vmatpush1.xpose.msra.mxu0 0.0
    %584 = vmatprep.subr.mxu0 0.0
    %585 = vmatpush1.xpose.msra.mxu0 0.0
    %586 = vmatprep.subr.mxu0 0.0
    %587 = vmatpush1.xpose.msra.mxu0 0.0
    %588 = vmatprep.subr.mxu0 0.0
    %589 = vmatpush1.xpose.msra.mxu0 %v558
    %590 = vmatprep.subr.mxu0 0.0
    %591 = vmatpush1.xpose.msra.mxu0 %v556
    %592 = vmatprep.subr.mxu0 0.0
    %593 = vmatpush2.xpose.msra.mxu0 0.0
    %594 = vmatprep.subr.mxu0 0.0
    %595 = vmatpush2.xpose.msra.mxu0 0.0
    %596 = vmatprep.subr.mxu0 0.0
    %597 = vmatpush2.xpose.msra.mxu0 0.0
    %598 = vmatprep.subr.mxu0 0.0
    %599 = vmatpush2.xpose.msra.mxu0 0.0
    %600 = vmatprep.subr.mxu0 0.0
    %601 = vmatpush2.xpose.msra.mxu0 0.0
    %602 = vmatprep.subr.mxu0 0.0
    %603 = vmatpush2.xpose.msra.mxu0 0.0
    %604 = vmatprep.subr.mxu0 0.0
    %605 = vmatpush2.xpose.msra.mxu0 0.0
    %606 = vmatprep.subr.mxu0 0.0
    %607 = vmatpush2.xpose.msra.mxu0 0.0
    %608 = vmatprep.subr.mxu0 0.0
    %609 = vmatpush2.xpose.msra.mxu0 0.0
    %610 = vmatprep.subr.mxu0 0.0
    %611 = vmatpush2.xpose.msra.mxu0 0.0
    %612 = vmatprep.subr.mxu0 0.0
    %613 = vmatpush2.xpose.msra.mxu0 0.0
    %614 = vmatprep.subr.mxu0 0.0
    %615 = vmatpush2.xpose.msra.mxu0 0.0
    %616 = vmatprep.subr.mxu0 0.0
    %617 = vmatpush2.xpose.msra.mxu0 0.0
    %618 = vmatprep.subr.mxu0 0.0
    %619 = vmatpush2.xpose.msra.mxu0 0.0
    %620 = vmatprep.subr.mxu0 0.0
    %621 = vmatpush2.xpose.msra.mxu0 0.0
    %622 = vmatprep.subr.mxu0 0.0
    %623 = vmatpush2.xpose.msra.mxu0 0.0
    %624 = vmatprep.mubr.f32.mxu0 0.0
    %625 = vmatmul.mubr.f32.gmra.mxu0 %v554
    %v626 = vpop.f32.mrf.mxu0
    %v627 = vadd.f32 0.0, %v626
    %v628 = vpop.f32.mrf.mxu0
    %629 = vdwg.mxu0
    %v631 = vsel %vm304, %v119, 0
    %v634 = vsel %vm304, %v211, 0
    %v637 = vsel %vm304, %v216, 0
    %639 = vmatprep.subr.mxu0 0.0
    %640 = vmatpush1.xpose.msra.mxu0 0.0
    %641 = vmatprep.subr.mxu0 0.0
    %642 = vmatpush1.xpose.msra.mxu0 0.0
    %643 = vmatprep.subr.mxu0 0.0
    %644 = vmatpush1.xpose.msra.mxu0 0.0
    %645 = vmatprep.subr.mxu0 0.0
    %646 = vmatpush1.xpose.msra.mxu0 0.0
    %647 = vmatprep.subr.mxu0 0.0
    %648 = vmatpush1.xpose.msra.mxu0 0.0
    %649 = vmatprep.subr.mxu0 0.0
    %650 = vmatpush1.xpose.msra.mxu0 0.0
    %651 = vmatprep.subr.mxu0 0.0
    %652 = vmatpush1.xpose.msra.mxu0 0.0
    %653 = vmatprep.subr.mxu0 0.0
    %654 = vmatpush1.xpose.msra.mxu0 0.0
    %655 = vmatprep.subr.mxu0 0.0
    %656 = vmatpush1.xpose.msra.mxu0 0.0
    %657 = vmatprep.subr.mxu0 0.0
    %658 = vmatpush1.xpose.msra.mxu0 0.0
    %659 = vmatprep.subr.mxu0 0.0
    %660 = vmatpush1.xpose.msra.mxu0 0.0
    %661 = vmatprep.subr.mxu0 0.0
    %662 = vmatpush1.xpose.msra.mxu0 0.0
    %663 = vmatprep.subr.mxu0 0.0
    %664 = vmatpush1.xpose.msra.mxu0 0.0
    %665 = vmatprep.subr.mxu0 0.0
    %666 = vmatpush1.xpose.msra.mxu0 0.0
    %667 = vmatprep.subr.mxu0 0.0
    %668 = vmatpush1.xpose.msra.mxu0 %v637
    %669 = vmatprep.subr.mxu0 0.0
    %670 = vmatpush1.xpose.msra.mxu0 %v634
    %671 = vmatprep.subr.mxu0 0.0
    %672 = vmatpush2.xpose.msra.mxu0 0.0
    %673 = vmatprep.subr.mxu0 0.0
    %674 = vmatpush2.xpose.msra.mxu0 0.0
    %675 = vmatprep.subr.mxu0 0.0
    %676 = vmatpush2.xpose.msra.mxu0 0.0
    %677 = vmatprep.subr.mxu0 0.0
    %678 = vmatpush2.xpose.msra.mxu0 0.0
    %679 = vmatprep.subr.mxu0 0.0
    %680 = vmatpush2.xpose.msra.mxu0 0.0
    %681 = vmatprep.subr.mxu0 0.0
    %682 = vmatpush2.xpose.msra.mxu0 0.0
    %683 = vmatprep.subr.mxu0 0.0
    %684 = vmatpush2.xpose.msra.mxu0 0.0
    %685 = vmatprep.subr.mxu0 0.0
    %686 = vmatpush2.xpose.msra.mxu0 0.0
    %687 = vmatprep.subr.mxu0 0.0
    %688 = vmatpush2.xpose.msra.mxu0 0.0
    %689 = vmatprep.subr.mxu0 0.0
    %690 = vmatpush2.xpose.msra.mxu0 0.0
    %691 = vmatprep.subr.mxu0 0.0
    %692 = vmatpush2.xpose.msra.mxu0 0.0
    %693 = vmatprep.subr.mxu0 0.0
    %694 = vmatpush2.xpose.msra.mxu0 0.0
    %695 = vmatprep.subr.mxu0 0.0
    %696 = vmatpush2.xpose.msra.mxu0 0.0
    %697 = vmatprep.subr.mxu0 0.0
    %698 = vmatpush2.xpose.msra.mxu0 0.0
    %699 = vmatprep.subr.mxu0 0.0
    %700 = vmatpush2.xpose.msra.mxu0 0.0
    %701 = vmatprep.subr.mxu0 0.0
    %702 = vmatpush2.xpose.msra.mxu0 0.0
    %703 = vmatprep.mubr.f32.mxu0 0.0
    %704 = vmatmul.mubr.f32.gmra.mxu0 %v631
    %v705 = vpop.f32.mrf.mxu0
    %v706 = vadd.f32 0.0, %v705
    %v707 = vpop.f32.mrf.mxu0
    %708 = vdwg.mxu0
    %709 = vrot.lane.b32.xlu0 %v119, 120
    %v710 = vpop.permute.xlu0 %709
    %711 = vrot.lane.b32.xlu0 %v211, 120
    %v712 = vpop.permute.xlu0 %711
    %713 = vrot.lane.b32.xlu0 %v216, 120
    %v714 = vpop.permute.xlu0 %713
    %v715 = vsel %vm304, %v710, 0
    %v717 = vsel %vm304, %v712, 0
    %v719 = vsel %vm304, %v714, 0
    %721 = vmatprep.subr.mxu0 0.0
    %722 = vmatpush1.xpose.msra.mxu0 0.0
    %723 = vmatprep.subr.mxu0 0.0
    %724 = vmatpush1.xpose.msra.mxu0 0.0
    %725 = vmatprep.subr.mxu0 0.0
    %726 = vmatpush1.xpose.msra.mxu0 0.0
    %727 = vmatprep.subr.mxu0 0.0
    %728 = vmatpush1.xpose.msra.mxu0 0.0
    %729 = vmatprep.subr.mxu0 0.0
    %730 = vmatpush1.xpose.msra.mxu0 0.0
    %731 = vmatprep.subr.mxu0 0.0
    %732 = vmatpush1.xpose.msra.mxu0 0.0
    %733 = vmatprep.subr.mxu0 0.0
    %734 = vmatpush1.xpose.msra.mxu0 0.0
    %735 = vmatprep.subr.mxu0 0.0
    %736 = vmatpush1.xpose.msra.mxu0 0.0
    %737 = vmatprep.subr.mxu0 0.0
    %738 = vmatpush1.xpose.msra.mxu0 0.0
    %739 = vmatprep.subr.mxu0 0.0
    %740 = vmatpush1.xpose.msra.mxu0 0.0
    %741 = vmatprep.subr.mxu0 0.0
    %742 = vmatpush1.xpose.msra.mxu0 0.0
    %743 = vmatprep.subr.mxu0 0.0
    %744 = vmatpush1.xpose.msra.mxu0 0.0
    %745 = vmatprep.subr.mxu0 0.0
    %746 = vmatpush1.xpose.msra.mxu0 0.0
    %747 = vmatprep.subr.mxu0 0.0
    %748 = vmatpush1.xpose.msra.mxu0 0.0
    %749 = vmatprep.subr.mxu0 0.0
    %750 = vmatpush1.xpose.msra.mxu0 %v719
    %751 = vmatprep.subr.mxu0 0.0
    %752 = vmatpush1.xpose.msra.mxu0 %v717
    %753 = vmatprep.subr.mxu0 0.0
    %754 = vmatpush2.xpose.msra.mxu0 0.0
    %755 = vmatprep.subr.mxu0 0.0
    %756 = vmatpush2.xpose.msra.mxu0 0.0
    %757 = vmatprep.subr.mxu0 0.0
    %758 = vmatpush2.xpose.msra.mxu0 0.0
    %759 = vmatprep.subr.mxu0 0.0
    %760 = vmatpush2.xpose.msra.mxu0 0.0
    %761 = vmatprep.subr.mxu0 0.0
    %762 = vmatpush2.xpose.msra.mxu0 0.0
    %763 = vmatprep.subr.mxu0 0.0
    %764 = vmatpush2.xpose.msra.mxu0 0.0
    %765 = vmatprep.subr.mxu0 0.0
    %766 = vmatpush2.xpose.msra.mxu0 0.0
    %767 = vmatprep.subr.mxu0 0.0
    %768 = vmatpush2.xpose.msra.mxu0 0.0
    %769 = vmatprep.subr.mxu0 0.0
    %770 = vmatpush2.xpose.msra.mxu0 0.0
    %771 = vmatprep.subr.mxu0 0.0
    %772 = vmatpush2.xpose.msra.mxu0 0.0
    %773 = vmatprep.subr.mxu0 0.0
    %774 = vmatpush2.xpose.msra.mxu0 0.0
    %775 = vmatprep.subr.mxu0 0.0
    %776 = vmatpush2.xpose.msra.mxu0 0.0
    %777 = vmatprep.subr.mxu0 0.0
    %778 = vmatpush2.xpose.msra.mxu0 0.0
    %779 = vmatprep.subr.mxu0 0.0
    %780 = vmatpush2.xpose.msra.mxu0 0.0
    %781 = vmatprep.subr.mxu0 0.0
    %782 = vmatpush2.xpose.msra.mxu0 0.0
    %783 = vmatprep.subr.mxu0 0.0
    %784 = vmatpush2.xpose.msra.mxu0 0.0
    %785 = vmatprep.mubr.f32.mxu0 0.0
    %786 = vmatmul.mubr.f32.gmra.mxu0 %v715
    %v787 = vpop.f32.mrf.mxu0
    %v788 = vadd.f32 0.0, %v787
    %v789 = vpop.f32.mrf.mxu0
    %790 = vdwg.mxu0
    %791 = vrot.lane.b32.xlu0 %v119, 112
    %v792 = vpop.permute.xlu0 %791
    %793 = vrot.lane.b32.xlu0 %v211, 112
    %v794 = vpop.permute.xlu0 %793
    %795 = vrot.lane.b32.xlu0 %v216, 112
    %v796 = vpop.permute.xlu0 %795
    %v797 = vsel %vm304, %v792, 0
    %v799 = vsel %vm304, %v794, 0
    %v801 = vsel %vm304, %v796, 0
    %803 = vmatprep.subr.mxu0 0.0
    %804 = vmatpush1.xpose.msra.mxu0 0.0
    %805 = vmatprep.subr.mxu0 0.0
    %806 = vmatpush1.xpose.msra.mxu0 0.0
    %807 = vmatprep.subr.mxu0 0.0
    %808 = vmatpush1.xpose.msra.mxu0 0.0
    %809 = vmatprep.subr.mxu0 0.0
    %810 = vmatpush1.xpose.msra.mxu0 0.0
    %811 = vmatprep.subr.mxu0 0.0
    %812 = vmatpush1.xpose.msra.mxu0 0.0
    %813 = vmatprep.subr.mxu0 0.0
    %814 = vmatpush1.xpose.msra.mxu0 0.0
    %815 = vmatprep.subr.mxu0 0.0
    %816 = vmatpush1.xpose.msra.mxu0 0.0
    %817 = vmatprep.subr.mxu0 0.0
    %818 = vmatpush1.xpose.msra.mxu0 0.0
    %819 = vmatprep.subr.mxu0 0.0
    %820 = vmatpush1.xpose.msra.mxu0 0.0
    %821 = vmatprep.subr.mxu0 0.0
    %822 = vmatpush1.xpose.msra.mxu0 0.0
    %823 = vmatprep.subr.mxu0 0.0
    %824 = vmatpush1.xpose.msra.mxu0 0.0
    %825 = vmatprep.subr.mxu0 0.0
    %826 = vmatpush1.xpose.msra.mxu0 0.0
    %827 = vmatprep.subr.mxu0 0.0
    %828 = vmatpush1.xpose.msra.mxu0 0.0
    %829 = vmatprep.subr.mxu0 0.0
    %830 = vmatpush1.xpose.msra.mxu0 0.0
    %831 = vmatprep.subr.mxu0 0.0
    %832 = vmatpush1.xpose.msra.mxu0 %v801
    %833 = vmatprep.subr.mxu0 0.0
    %834 = vmatpush1.xpose.msra.mxu0 %v799
    %835 = vmatprep.subr.mxu0 0.0
    %836 = vmatpush2.xpose.msra.mxu0 0.0
    %837 = vmatprep.subr.mxu0 0.0
    %838 = vmatpush2.xpose.msra.mxu0 0.0
    %839 = vmatprep.subr.mxu0 0.0
    %840 = vmatpush2.xpose.msra.mxu0 0.0
    %841 = vmatprep.subr.mxu0 0.0
    %842 = vmatpush2.xpose.msra.mxu0 0.0
    %843 = vmatprep.subr.mxu0 0.0
    %844 = vmatpush2.xpose.msra.mxu0 0.0
    %845 = vmatprep.subr.mxu0 0.0
    %846 = vmatpush2.xpose.msra.mxu0 0.0
    %847 = vmatprep.subr.mxu0 0.0
    %848 = vmatpush2.xpose.msra.mxu0 0.0
    %849 = vmatprep.subr.mxu0 0.0
    %850 = vmatpush2.xpose.msra.mxu0 0.0
    %851 = vmatprep.subr.mxu0 0.0
    %852 = vmatpush2.xpose.msra.mxu0 0.0
    %853 = vmatprep.subr.mxu0 0.0
    %854 = vmatpush2.xpose.msra.mxu0 0.0
    %855 = vmatprep.subr.mxu0 0.0
    %856 = vmatpush2.xpose.msra.mxu0 0.0
    %857 = vmatprep.subr.mxu0 0.0
    %858 = vmatpush2.xpose.msra.mxu0 0.0
    %859 = vmatprep.subr.mxu0 0.0
    %860 = vmatpush2.xpose.msra.mxu0 0.0
    %861 = vmatprep.subr.mxu0 0.0
    %862 = vmatpush2.xpose.msra.mxu0 0.0
    %863 = vmatprep.subr.mxu0 0.0
    %864 = vmatpush2.xpose.msra.mxu0 0.0
    %865 = vmatprep.subr.mxu0 0.0
    %866 = vmatpush2.xpose.msra.mxu0 0.0
    %867 = vmatprep.mubr.f32.mxu0 0.0
    %868 = vmatmul.mubr.f32.gmra.mxu0 %v797
    %v869 = vpop.f32.mrf.mxu0
    %v870 = vadd.f32 0.0, %v869
    %v871 = vpop.f32.mrf.mxu0
    %872 = vdwg.mxu0
    %873 = vrot.lane.b32.xlu0 %v119, 104
    %v874 = vpop.permute.xlu0 %873
    %875 = vrot.lane.b32.xlu0 %v211, 104
    %v876 = vpop.permute.xlu0 %875
    %877 = vrot.lane.b32.xlu0 %v216, 104
    %v878 = vpop.permute.xlu0 %877
    %v879 = vsel %vm304, %v874, 0
    %v881 = vsel %vm304, %v876, 0
    %v883 = vsel %vm304, %v878, 0
    %885 = vmatprep.subr.mxu0 0.0
    %886 = vmatpush1.xpose.msra.mxu0 0.0
    %887 = vmatprep.subr.mxu0 0.0
    %888 = vmatpush1.xpose.msra.mxu0 0.0
    %889 = vmatprep.subr.mxu0 0.0
    %890 = vmatpush1.xpose.msra.mxu0 0.0
    %891 = vmatprep.subr.mxu0 0.0
    %892 = vmatpush1.xpose.msra.mxu0 0.0
    %893 = vmatprep.subr.mxu0 0.0
    %894 = vmatpush1.xpose.msra.mxu0 0.0
    %895 = vmatprep.subr.mxu0 0.0
    %896 = vmatpush1.xpose.msra.mxu0 0.0
    %897 = vmatprep.subr.mxu0 0.0
    %898 = vmatpush1.xpose.msra.mxu0 0.0
    %899 = vmatprep.subr.mxu0 0.0
    %900 = vmatpush1.xpose.msra.mxu0 0.0
    %901 = vmatprep.subr.mxu0 0.0
    %902 = vmatpush1.xpose.msra.mxu0 0.0
    %903 = vmatprep.subr.mxu0 0.0
    %904 = vmatpush1.xpose.msra.mxu0 0.0
    %905 = vmatprep.subr.mxu0 0.0
    %906 = vmatpush1.xpose.msra.mxu0 0.0
    %907 = vmatprep.subr.mxu0 0.0
    %908 = vmatpush1.xpose.msra.mxu0 0.0
    %909 = vmatprep.subr.mxu0 0.0
    %910 = vmatpush1.xpose.msra.mxu0 0.0
    %911 = vmatprep.subr.mxu0 0.0
    %912 = vmatpush1.xpose.msra.mxu0 0.0
    %913 = vmatprep.subr.mxu0 0.0
    %914 = vmatpush1.xpose.msra.mxu0 %v883
    %915 = vmatprep.subr.mxu0 0.0
    %916 = vmatpush1.xpose.msra.mxu0 %v881
    %917 = vmatprep.subr.mxu0 0.0
    %918 = vmatpush2.xpose.msra.mxu0 0.0
    %919 = vmatprep.subr.mxu0 0.0
    %920 = vmatpush2.xpose.msra.mxu0 0.0
    %921 = vmatprep.subr.mxu0 0.0
    %922 = vmatpush2.xpose.msra.mxu0 0.0
    %923 = vmatprep.subr.mxu0 0.0
    %924 = vmatpush2.xpose.msra.mxu0 0.0
    %925 = vmatprep.subr.mxu0 0.0
    %926 = vmatpush2.xpose.msra.mxu0 0.0
    %927 = vmatprep.subr.mxu0 0.0
    %928 = vmatpush2.xpose.msra.mxu0 0.0
    %929 = vmatprep.subr.mxu0 0.0
    %930 = vmatpush2.xpose.msra.mxu0 0.0
    %931 = vmatprep.subr.mxu0 0.0
    %932 = vmatpush2.xpose.msra.mxu0 0.0
    %933 = vmatprep.subr.mxu0 0.0
    %934 = vmatpush2.xpose.msra.mxu0 0.0
    %935 = vmatprep.subr.mxu0 0.0
    %936 = vmatpush2.xpose.msra.mxu0 0.0
    %937 = vmatprep.subr.mxu0 0.0
    %938 = vmatpush2.xpose.msra.mxu0 0.0
    %939 = vmatprep.subr.mxu0 0.0
    %940 = vmatpush2.xpose.msra.mxu0 0.0
    %941 = vmatprep.subr.mxu0 0.0
    %942 = vmatpush2.xpose.msra.mxu0 0.0
    %943 = vmatprep.subr.mxu0 0.0
    %944 = vmatpush2.xpose.msra.mxu0 0.0
    %945 = vmatprep.subr.mxu0 0.0
    %946 = vmatpush2.xpose.msra.mxu0 0.0
    %947 = vmatprep.subr.mxu0 0.0
    %948 = vmatpush2.xpose.msra.mxu0 0.0
    %949 = vmatprep.mubr.f32.mxu0 0.0
    %950 = vmatmul.mubr.f32.gmra.mxu0 %v879
    %v951 = vpop.f32.mrf.mxu0
    %v952 = vadd.f32 0.0, %v951
    %v953 = vpop.f32.mrf.mxu0
    %954 = vdwg.mxu0
    %v955 = vmul.f32 %v381, 0.35355338
    %v956 = vmul.f32 %v463, 0.35355338
    %v957 = vmul.f32 %v545, 0.35355338
    %v958 = vmul.f32 %v627, 0.35355338
    %v959 = vmul.f32 %v706, 0.35355338
    %v960 = vmul.f32 %v788, 0.35355338
    %v961 = vmul.f32 %v870, 0.35355338
    %v962 = vmul.f32 %v952, 0.35355338
    %vm963 = vcmask 130048
    %v964 = vsel %vm963, %v955, -inf
    %965 = vmax.xlane.f32.xlu0 %v964
    %v966 = vpop.xlane.xlu0 %965
    %v967 = vsel %vm963, %v956, -inf
    %968 = vmax.xlane.f32.xlu0 %v967
    %v969 = vpop.xlane.xlu0 %968
    %v970 = vsel %vm963, %v957, -inf
    %971 = vmax.xlane.f32.xlu0 %v970
    %v972 = vpop.xlane.xlu0 %971
    %v973 = vsel %vm963, %v958, -inf
    %974 = vmax.xlane.f32.xlu0 %v973
    %v975 = vpop.xlane.xlu0 %974
    %v976 = vsel %vm963, %v959, -inf
    %977 = vmax.xlane.f32.xlu0 %v976
    %v978 = vpop.xlane.xlu0 %977
    %v979 = vsel %vm963, %v960, -inf
    %980 = vmax.xlane.f32.xlu0 %v979
    %v981 = vpop.xlane.xlu0 %980
    %v982 = vsel %vm963, %v961, -inf
    %983 = vmax.xlane.f32.xlu0 %v982
    %v984 = vpop.xlane.xlu0 %983
    %v985 = vsel %vm963, %v962, -inf
    %986 = vmax.xlane.f32.xlu0 %v985
    %v987 = vpop.xlane.xlu0 %986
    %v988 = vsub.f32 %v955, %v966
    %v989 = vsub.f32 %v956, %v969
    %v990 = vsub.f32 %v957, %v972
    %v991 = vsub.f32 %v958, %v975
    %v992 = vsub.f32 %v959, %v978
    %v993 = vsub.f32 %v960, %v981
    %v994 = vsub.f32 %v961, %v984
    %v995 = vsub.f32 %v962, %v987
    %v996 = vmul.f32 %v988, 1.442695
    %v997 = vpow.pop %v996
    %v998 = vmul.f32 %v989, 1.442695
    %v999 = vpow.pop %v998
    %v1000 = vmul.f32 %v990, 1.442695
    %v1001 = vpow.pop %v1000
    %v1002 = vmul.f32 %v991, 1.442695
    %v1003 = vpow.pop %v1002
    %v1004 = vmul.f32 %v992, 1.442695
    %v1005 = vpow.pop %v1004
    %v1006 = vmul.f32 %v993, 1.442695
    %v1007 = vpow.pop %v1006
    %v1008 = vmul.f32 %v994, 1.442695
    %v1009 = vpow.pop %v1008
    %v1010 = vmul.f32 %v995, 1.442695
    %v1011 = vpow.pop %v1010
    %v1012 = vsel %vm963, %v997, 0.0
    %1013 = vadd.xlane.f32.xlu0 %v1012
    %v1014 = vpop.xlane.xlu0 %1013
    %v1015 = vsel %vm963, %v999, 0.0
    %1016 = vadd.xlane.f32.xlu0 %v1015
    %v1017 = vpop.xlane.xlu0 %1016
    %v1018 = vsel %vm963, %v1001, 0.0
    %1019 = vadd.xlane.f32.xlu0 %v1018
    %v1020 = vpop.xlane.xlu0 %1019
    %v1021 = vsel %vm963, %v1003, 0.0
    %1022 = vadd.xlane.f32.xlu0 %v1021
    %v1023 = vpop.xlane.xlu0 %1022
    %v1024 = vsel %vm963, %v1005, 0.0
    %1025 = vadd.xlane.f32.xlu0 %v1024
    %v1026 = vpop.xlane.xlu0 %1025
    %v1027 = vsel %vm963, %v1007, 0.0
    %1028 = vadd.xlane.f32.xlu0 %v1027
    %v1029 = vpop.xlane.xlu0 %1028
    %v1030 = vsel %vm963, %v1009, 0.0
    %1031 = vadd.xlane.f32.xlu0 %v1030
    %v1032 = vpop.xlane.xlu0 %1031
    %v1033 = vsel %vm963, %v1011, 0.0
    %1034 = vadd.xlane.f32.xlu0 %v1033
    %v1035 = vpop.xlane.xlu0 %1034
    %v1036 = vrcp.pop %v1014
    %v1037 = vrcp.pop %v1017
    %v1038 = vrcp.pop %v1020
    %v1039 = vrcp.pop %v1023
    %v1040 = vrcp.pop %v1026
    %v1041 = vrcp.pop %v1029
    %v1042 = vrcp.pop %v1032
    %v1043 = vrcp.pop %v1035
    %v1044 = vmul.f32 %v997, %v1036
    %v1045 = vmul.f32 %v999, %v1037
    %v1046 = vmul.f32 %v1001, %v1038
    %v1047 = vmul.f32 %v1003, %v1039
    %v1048 = vmul.f32 %v1005, %v1040
    %v1049 = vmul.f32 %v1007, %v1041
    %v1050 = vmul.f32 %v1009, %v1042
    %v1051 = vmul.f32 %v1011, %v1043
    %v1052 = vld [vmem:[%s3] sm:$0x1]
    %v1054 = vsel %vm963, %v1044, 0
    %1056 = vmatprep.subr.mxu0 0.0
    %1057 = vmatpush1.msra.mxu0 0.0
    %1058 = vmatprep.subr.mxu0 0.0
    %1059 = vmatpush1.msra.mxu0 0.0
    %1060 = vmatprep.subr.mxu0 0.0
    %1061 = vmatpush1.msra.mxu0 0.0
    %1062 = vmatprep.subr.mxu0 0.0
    %1063 = vmatpush1.msra.mxu0 0.0
    %1064 = vmatprep.subr.mxu0 0.0
    %1065 = vmatpush1.msra.mxu0 0.0
    %1066 = vmatprep.subr.mxu0 0.0
    %1067 = vmatpush1.msra.mxu0 0.0
    %1068 = vmatprep.subr.mxu0 0.0
    %1069 = vmatpush1.msra.mxu0 0.0
    %1070 = vmatprep.subr.mxu0 0.0
    %1071 = vmatpush1.msra.mxu0 0.0
    %1072 = vmatprep.subr.mxu0 0.0
    %1073 = vmatpush1.msra.mxu0 0.0
    %1074 = vmatprep.subr.mxu0 0.0
    %1075 = vmatpush1.msra.mxu0 0.0
    %1076 = vmatprep.subr.mxu0 0.0
    %1077 = vmatpush1.msra.mxu0 0.0
    %1078 = vmatprep.subr.mxu0 0.0
    %1079 = vmatpush1.msra.mxu0 0.0
    %1080 = vmatprep.subr.mxu0 0.0
    %1081 = vmatpush1.msra.mxu0 0.0
    %1082 = vmatprep.subr.mxu0 0.0
    %1083 = vmatpush1.msra.mxu0 0.0
    %1084 = vmatprep.subr.mxu0 0.0
    %1085 = vmatpush1.msra.mxu0 %v291
    %1086 = vmatprep.subr.mxu0 0.0
    %1087 = vmatpush1.msra.mxu0 %v286
    %1088 = vmatprep.subr.mxu0 0.0
    %1089 = vmatpush2.msra.mxu0 0.0
    %1090 = vmatprep.subr.mxu0 0.0
    %1091 = vmatpush2.msra.mxu0 0.0
    %1092 = vmatprep.subr.mxu0 0.0
    %1093 = vmatpush2.msra.mxu0 0.0
    %1094 = vmatprep.subr.mxu0 0.0
    %1095 = vmatpush2.msra.mxu0 0.0
    %1096 = vmatprep.subr.mxu0 0.0
    %1097 = vmatpush2.msra.mxu0 0.0
    %1098 = vmatprep.subr.mxu0 0.0
    %1099 = vmatpush2.msra.mxu0 0.0
    %1100 = vmatprep.subr.mxu0 0.0
    %1101 = vmatpush2.msra.mxu0 0.0
    %1102 = vmatprep.subr.mxu0 0.0
    %1103 = vmatpush2.msra.mxu0 0.0
    %1104 = vmatprep.subr.mxu0 0.0
    %1105 = vmatpush2.msra.mxu0 0.0
    %1106 = vmatprep.subr.mxu0 0.0
    %1107 = vmatpush2.msra.mxu0 0.0
    %1108 = vmatprep.subr.mxu0 0.0
    %1109 = vmatpush2.msra.mxu0 0.0
    %1110 = vmatprep.subr.mxu0 0.0
    %1111 = vmatpush2.msra.mxu0 0.0
    %1112 = vmatprep.subr.mxu0 0.0
    %1113 = vmatpush2.msra.mxu0 0.0
    %1114 = vmatprep.subr.mxu0 0.0
    %1115 = vmatpush2.msra.mxu0 0.0
    %1116 = vmatprep.subr.mxu0 0.0
    %1117 = vmatpush2.msra.mxu0 0.0
    %1118 = vmatprep.subr.mxu0 0.0
    %1119 = vmatpush2.msra.mxu0 0.0
    %1120 = vmatprep.mubr.f32.mxu0 0.0
    %1121 = vmatmul.mubr.f32.gmra.mxu0 %v1054
    %v1122 = vpop.f32.mrf.mxu0
    %v1123 = vadd.f32 0.0, %v1122
    %v1124 = vpop.f32.mrf.mxu0
    %1125 = vdwg.mxu0
    %1128 = vrot.lane.b32.xlu0 %v286, 120
    %v1129 = vpop.permute.xlu0 %1128
    %1130 = vrot.lane.b32.xlu0 %v291, 120
    %v1131 = vpop.permute.xlu0 %1130
    %v1135 = vsel %vm963, %v1045, 0
    %1137 = vmatprep.subr.mxu0 0.0
    %1138 = vmatpush1.msra.mxu0 0.0
    %1139 = vmatprep.subr.mxu0 0.0
    %1140 = vmatpush1.msra.mxu0 0.0
    %1141 = vmatprep.subr.mxu0 0.0
    %1142 = vmatpush1.msra.mxu0 0.0
    %1143 = vmatprep.subr.mxu0 0.0
    %1144 = vmatpush1.msra.mxu0 0.0
    %1145 = vmatprep.subr.mxu0 0.0
    %1146 = vmatpush1.msra.mxu0 0.0
    %1147 = vmatprep.subr.mxu0 0.0
    %1148 = vmatpush1.msra.mxu0 0.0
    %1149 = vmatprep.subr.mxu0 0.0
    %1150 = vmatpush1.msra.mxu0 0.0
    %1151 = vmatprep.subr.mxu0 0.0
    %1152 = vmatpush1.msra.mxu0 0.0
    %1153 = vmatprep.subr.mxu0 0.0
    %1154 = vmatpush1.msra.mxu0 0.0
    %1155 = vmatprep.subr.mxu0 0.0
    %1156 = vmatpush1.msra.mxu0 0.0
    %1157 = vmatprep.subr.mxu0 0.0
    %1158 = vmatpush1.msra.mxu0 0.0
    %1159 = vmatprep.subr.mxu0 0.0
    %1160 = vmatpush1.msra.mxu0 0.0
    %1161 = vmatprep.subr.mxu0 0.0
    %1162 = vmatpush1.msra.mxu0 0.0
    %1163 = vmatprep.subr.mxu0 0.0
    %1164 = vmatpush1.msra.mxu0 0.0
    %1165 = vmatprep.subr.mxu0 0.0
    %1166 = vmatpush1.msra.mxu0 %v1131
    %1167 = vmatprep.subr.mxu0 0.0
    %1168 = vmatpush1.msra.mxu0 %v1129
    %1169 = vmatprep.subr.mxu0 0.0
    %1170 = vmatpush2.msra.mxu0 0.0
    %1171 = vmatprep.subr.mxu0 0.0
    %1172 = vmatpush2.msra.mxu0 0.0
    %1173 = vmatprep.subr.mxu0 0.0
    %1174 = vmatpush2.msra.mxu0 0.0
    %1175 = vmatprep.subr.mxu0 0.0
    %1176 = vmatpush2.msra.mxu0 0.0
    %1177 = vmatprep.subr.mxu0 0.0
    %1178 = vmatpush2.msra.mxu0 0.0
    %1179 = vmatprep.subr.mxu0 0.0
    %1180 = vmatpush2.msra.mxu0 0.0
    %1181 = vmatprep.subr.mxu0 0.0
    %1182 = vmatpush2.msra.mxu0 0.0
    %1183 = vmatprep.subr.mxu0 0.0
    %1184 = vmatpush2.msra.mxu0 0.0
    %1185 = vmatprep.subr.mxu0 0.0
    %1186 = vmatpush2.msra.mxu0 0.0
    %1187 = vmatprep.subr.mxu0 0.0
    %1188 = vmatpush2.msra.mxu0 0.0
    %1189 = vmatprep.subr.mxu0 0.0
    %1190 = vmatpush2.msra.mxu0 0.0
    %1191 = vmatprep.subr.mxu0 0.0
    %1192 = vmatpush2.msra.mxu0 0.0
    %1193 = vmatprep.subr.mxu0 0.0
    %1194 = vmatpush2.msra.mxu0 0.0
    %1195 = vmatprep.subr.mxu0 0.0
    %1196 = vmatpush2.msra.mxu0 0.0
    %1197 = vmatprep.subr.mxu0 0.0
    %1198 = vmatpush2.msra.mxu0 0.0
    %1199 = vmatprep.subr.mxu0 0.0
    %1200 = vmatpush2.msra.mxu0 0.0
    %1201 = vmatprep.mubr.f32.mxu0 0.0
    %1202 = vmatmul.mubr.f32.gmra.mxu0 %v1135
    %v1203 = vpop.f32.mrf.mxu0
    %v1204 = vadd.f32 0.0, %v1203
    %v1205 = vpop.f32.mrf.mxu0
    %1206 = vdwg.mxu0
    %v1208 = vsel %vm304, %v1204, 0
    %1210 = vmatprep.subr.mxu0 0.0
    %1211 = vmatpush1.msra.mxu0 0.0
    %1212 = vmatprep.subr.mxu0 0.0
    %1213 = vmatpush1.msra.mxu0 0.0
    %1214 = vmatprep.subr.mxu0 0.0
    %1215 = vmatpush1.msra.mxu0 0.0
    %1216 = vmatprep.subr.mxu0 0.0
    %1217 = vmatpush1.msra.mxu0 0.0
    %1218 = vmatprep.subr.mxu0 0.0
    %1219 = vmatpush1.msra.mxu0 0.0
    %1220 = vmatprep.subr.mxu0 0.0
    %1221 = vmatpush1.msra.mxu0 0.0
    %1222 = vmatprep.subr.mxu0 0.0
    %1223 = vmatpush1.msra.mxu0 0.0
    %1224 = vmatprep.subr.mxu0 0.0
    %1225 = vmatpush1.msra.mxu0 0.0
    %1226 = vmatprep.subr.mxu0 0.0
    %1227 = vmatpush1.msra.mxu0 0.0
    %1228 = vmatprep.subr.mxu0 0.0
    %1229 = vmatpush1.msra.mxu0 0.0
    %1230 = vmatprep.subr.mxu0 0.0
    %1231 = vmatpush1.msra.mxu0 0.0
    %1232 = vmatprep.subr.mxu0 0.0
    %1233 = vmatpush1.msra.mxu0 0.0
    %1234 = vmatprep.subr.mxu0 0.0
    %1235 = vmatpush1.msra.mxu0 0.0
    %1236 = vmatprep.subr.mxu0 0.0
    %1237 = vmatpush1.msra.mxu0 0.0
    %1238 = vmatprep.subr.mxu0 0.0
    %1239 = vmatpush1.msra.mxu0 0.0
    %1240 = vmatprep.subr.mxu0 0.0
    %1241 = vmatpush1.msra.mxu0 %v37
    %1242 = vmatprep.subr.mxu0 0.0
    %1243 = vmatpush2.msra.mxu0 0.0
    %1244 = vmatprep.subr.mxu0 0.0
    %1245 = vmatpush2.msra.mxu0 0.0
    %1246 = vmatprep.subr.mxu0 0.0
    %1247 = vmatpush2.msra.mxu0 0.0
    %1248 = vmatprep.subr.mxu0 0.0
    %1249 = vmatpush2.msra.mxu0 0.0
    %1250 = vmatprep.subr.mxu0 0.0
    %1251 = vmatpush2.msra.mxu0 0.0
    %1252 = vmatprep.subr.mxu0 0.0
    %1253 = vmatpush2.msra.mxu0 0.0
    %1254 = vmatprep.subr.mxu0 0.0
    %1255 = vmatpush2.msra.mxu0 0.0
    %1256 = vmatprep.subr.mxu0 0.0
    %1257 = vmatpush2.msra.mxu0 0.0
    %1258 = vmatprep.subr.mxu0 0.0
    %1259 = vmatpush2.msra.mxu0 0.0
    %1260 = vmatprep.subr.mxu0 0.0
    %1261 = vmatpush2.msra.mxu0 0.0
    %1262 = vmatprep.subr.mxu0 0.0
    %1263 = vmatpush2.msra.mxu0 0.0
    %1264 = vmatprep.subr.mxu0 0.0
    %1265 = vmatpush2.msra.mxu0 0.0
    %1266 = vmatprep.subr.mxu0 0.0
    %1267 = vmatpush2.msra.mxu0 0.0
    %1268 = vmatprep.subr.mxu0 0.0
    %1269 = vmatpush2.msra.mxu0 0.0
    %1270 = vmatprep.subr.mxu0 0.0
    %1271 = vmatpush2.msra.mxu0 0.0
    %1272 = vmatprep.subr.mxu0 0.0
    %1273 = vmatpush2.msra.mxu0 0.0
    %1274 = vmatprep.mubr.f32.mxu0 0.0
    %1275 = vmatmul.mubr.f32.gmra.mxu0 %v1208
    %v1276 = vpop.f32.mrf.mxu0
    %v1277 = vadd.f32 0.0, %v1276
    %v1278 = vpop.f32.mrf.mxu0
    %1279 = vdwg.mxu0
    %v1281 = vsel %vm304, %v1123, 0
    %1283 = vmatprep.subr.mxu0 0.0
    %1284 = vmatpush1.msra.mxu0 0.0
    %1285 = vmatprep.subr.mxu0 0.0
    %1286 = vmatpush1.msra.mxu0 0.0
    %1287 = vmatprep.subr.mxu0 0.0
    %1288 = vmatpush1.msra.mxu0 0.0
    %1289 = vmatprep.subr.mxu0 0.0
    %1290 = vmatpush1.msra.mxu0 0.0
    %1291 = vmatprep.subr.mxu0 0.0
    %1292 = vmatpush1.msra.mxu0 0.0
    %1293 = vmatprep.subr.mxu0 0.0
    %1294 = vmatpush1.msra.mxu0 0.0
    %1295 = vmatprep.subr.mxu0 0.0
    %1296 = vmatpush1.msra.mxu0 0.0
    %1297 = vmatprep.subr.mxu0 0.0
    %1298 = vmatpush1.msra.mxu0 0.0
    %1299 = vmatprep.subr.mxu0 0.0
    %1300 = vmatpush1.msra.mxu0 0.0
    %1301 = vmatprep.subr.mxu0 0.0
    %1302 = vmatpush1.msra.mxu0 0.0
    %1303 = vmatprep.subr.mxu0 0.0
    %1304 = vmatpush1.msra.mxu0 0.0
    %1305 = vmatprep.subr.mxu0 0.0
    %1306 = vmatpush1.msra.mxu0 0.0
    %1307 = vmatprep.subr.mxu0 0.0
    %1308 = vmatpush1.msra.mxu0 0.0
    %1309 = vmatprep.subr.mxu0 0.0
    %1310 = vmatpush1.msra.mxu0 0.0
    %1311 = vmatprep.subr.mxu0 0.0
    %1312 = vmatpush1.msra.mxu0 0.0
    %1313 = vmatprep.subr.mxu0 0.0
    %1314 = vmatpush1.msra.mxu0 %v36
    %1315 = vmatprep.subr.mxu0 0.0
    %1316 = vmatpush2.msra.mxu0 0.0
    %1317 = vmatprep.subr.mxu0 0.0
    %1318 = vmatpush2.msra.mxu0 0.0
    %1319 = vmatprep.subr.mxu0 0.0
    %1320 = vmatpush2.msra.mxu0 0.0
    %1321 = vmatprep.subr.mxu0 0.0
    %1322 = vmatpush2.msra.mxu0 0.0
    %1323 = vmatprep.subr.mxu0 0.0
    %1324 = vmatpush2.msra.mxu0 0.0
    %1325 = vmatprep.subr.mxu0 0.0
    %1326 = vmatpush2.msra.mxu0 0.0
    %1327 = vmatprep.subr.mxu0 0.0
    %1328 = vmatpush2.msra.mxu0 0.0
    %1329 = vmatprep.subr.mxu0 0.0
    %1330 = vmatpush2.msra.mxu0 0.0
    %1331 = vmatprep.subr.mxu0 0.0
    %1332 = vmatpush2.msra.mxu0 0.0
    %1333 = vmatprep.subr.mxu0 0.0
    %1334 = vmatpush2.msra.mxu0 0.0
    %1335 = vmatprep.subr.mxu0 0.0
    %1336 = vmatpush2.msra.mxu0 0.0
    %1337 = vmatprep.subr.mxu0 0.0
    %1338 = vmatpush2.msra.mxu0 0.0
    %1339 = vmatprep.subr.mxu0 0.0
    %1340 = vmatpush2.msra.mxu0 0.0
    %1341 = vmatprep.subr.mxu0 0.0
    %1342 = vmatpush2.msra.mxu0 0.0
    %1343 = vmatprep.subr.mxu0 0.0
    %1344 = vmatpush2.msra.mxu0 0.0
    %1345 = vmatprep.subr.mxu0 0.0
    %1346 = vmatpush2.msra.mxu0 0.0
    %1347 = vmatprep.mubr.f32.mxu0 0.0
    %1348 = vmatmul.mubr.f32.gmra.mxu0 %v1281
    %v1349 = vpop.f32.mrf.mxu0
    %v1350 = vadd.f32 %v1277, %v1349
    %v1351 = vpop.f32.mrf.mxu0
    %1352 = vdwg.mxu0
    %1353 = vrot.lane.b32.xlu0 %v286, 112
    %v1354 = vpop.permute.xlu0 %1353
    %1355 = vrot.lane.b32.xlu0 %v291, 112
    %v1356 = vpop.permute.xlu0 %1355
    %v1360 = vsel %vm963, %v1046, 0
    %1362 = vmatprep.subr.mxu0 0.0
    %1363 = vmatpush1.msra.mxu0 0.0
    %1364 = vmatprep.subr.mxu0 0.0
    %1365 = vmatpush1.msra.mxu0 0.0
    %1366 = vmatprep.subr.mxu0 0.0
    %1367 = vmatpush1.msra.mxu0 0.0
    %1368 = vmatprep.subr.mxu0 0.0
    %1369 = vmatpush1.msra.mxu0 0.0
    %1370 = vmatprep.subr.mxu0 0.0
    %1371 = vmatpush1.msra.mxu0 0.0
    %1372 = vmatprep.subr.mxu0 0.0
    %1373 = vmatpush1.msra.mxu0 0.0
    %1374 = vmatprep.subr.mxu0 0.0
    %1375 = vmatpush1.msra.mxu0 0.0
    %1376 = vmatprep.subr.mxu0 0.0
    %1377 = vmatpush1.msra.mxu0 0.0
    %1378 = vmatprep.subr.mxu0 0.0
    %1379 = vmatpush1.msra.mxu0 0.0
    %1380 = vmatprep.subr.mxu0 0.0
    %1381 = vmatpush1.msra.mxu0 0.0
    %1382 = vmatprep.subr.mxu0 0.0
    %1383 = vmatpush1.msra.mxu0 0.0
    %1384 = vmatprep.subr.mxu0 0.0
    %1385 = vmatpush1.msra.mxu0 0.0
    %1386 = vmatprep.subr.mxu0 0.0
    %1387 = vmatpush1.msra.mxu0 0.0
    %1388 = vmatprep.subr.mxu0 0.0
    %1389 = vmatpush1.msra.mxu0 0.0
    %1390 = vmatprep.subr.mxu0 0.0
    %1391 = vmatpush1.msra.mxu0 %v1356
    %1392 = vmatprep.subr.mxu0 0.0
    %1393 = vmatpush1.msra.mxu0 %v1354
    %1394 = vmatprep.subr.mxu0 0.0
    %1395 = vmatpush2.msra.mxu0 0.0
    %1396 = vmatprep.subr.mxu0 0.0
    %1397 = vmatpush2.msra.mxu0 0.0
    %1398 = vmatprep.subr.mxu0 0.0
    %1399 = vmatpush2.msra.mxu0 0.0
    %1400 = vmatprep.subr.mxu0 0.0
    %1401 = vmatpush2.msra.mxu0 0.0
    %1402 = vmatprep.subr.mxu0 0.0
    %1403 = vmatpush2.msra.mxu0 0.0
    %1404 = vmatprep.subr.mxu0 0.0
    %1405 = vmatpush2.msra.mxu0 0.0
    %1406 = vmatprep.subr.mxu0 0.0
    %1407 = vmatpush2.msra.mxu0 0.0
    %1408 = vmatprep.subr.mxu0 0.0
    %1409 = vmatpush2.msra.mxu0 0.0
    %1410 = vmatprep.subr.mxu0 0.0
    %1411 = vmatpush2.msra.mxu0 0.0
    %1412 = vmatprep.subr.mxu0 0.0
    %1413 = vmatpush2.msra.mxu0 0.0
    %1414 = vmatprep.subr.mxu0 0.0
    %1415 = vmatpush2.msra.mxu0 0.0
    %1416 = vmatprep.subr.mxu0 0.0
    %1417 = vmatpush2.msra.mxu0 0.0
    %1418 = vmatprep.subr.mxu0 0.0
    %1419 = vmatpush2.msra.mxu0 0.0
    %1420 = vmatprep.subr.mxu0 0.0
    %1421 = vmatpush2.msra.mxu0 0.0
    %1422 = vmatprep.subr.mxu0 0.0
    %1423 = vmatpush2.msra.mxu0 0.0
    %1424 = vmatprep.subr.mxu0 0.0
    %1425 = vmatpush2.msra.mxu0 0.0
    %1426 = vmatprep.mubr.f32.mxu0 0.0
    %1427 = vmatmul.mubr.f32.gmra.mxu0 %v1360
    %v1428 = vpop.f32.mrf.mxu0
    %v1429 = vadd.f32 0.0, %v1428
    %v1430 = vpop.f32.mrf.mxu0
    %1431 = vdwg.mxu0
    %v1433 = vsel %vm304, %v1429, 0
    %1435 = vmatprep.subr.mxu0 0.0
    %1436 = vmatpush1.msra.mxu0 0.0
    %1437 = vmatprep.subr.mxu0 0.0
    %1438 = vmatpush1.msra.mxu0 0.0
    %1439 = vmatprep.subr.mxu0 0.0
    %1440 = vmatpush1.msra.mxu0 0.0
    %1441 = vmatprep.subr.mxu0 0.0
    %1442 = vmatpush1.msra.mxu0 0.0
    %1443 = vmatprep.subr.mxu0 0.0
    %1444 = vmatpush1.msra.mxu0 0.0
    %1445 = vmatprep.subr.mxu0 0.0
    %1446 = vmatpush1.msra.mxu0 0.0
    %1447 = vmatprep.subr.mxu0 0.0
    %1448 = vmatpush1.msra.mxu0 0.0
    %1449 = vmatprep.subr.mxu0 0.0
    %1450 = vmatpush1.msra.mxu0 0.0
    %1451 = vmatprep.subr.mxu0 0.0
    %1452 = vmatpush1.msra.mxu0 0.0
    %1453 = vmatprep.subr.mxu0 0.0
    %1454 = vmatpush1.msra.mxu0 0.0
    %1455 = vmatprep.subr.mxu0 0.0
    %1456 = vmatpush1.msra.mxu0 0.0
    %1457 = vmatprep.subr.mxu0 0.0
    %1458 = vmatpush1.msra.mxu0 0.0
    %1459 = vmatprep.subr.mxu0 0.0
    %1460 = vmatpush1.msra.mxu0 0.0
    %1461 = vmatprep.subr.mxu0 0.0
    %1462 = vmatpush1.msra.mxu0 0.0
    %1463 = vmatprep.subr.mxu0 0.0
    %1464 = vmatpush1.msra.mxu0 0.0
    %1465 = vmatprep.subr.mxu0 0.0
    %1466 = vmatpush1.msra.mxu0 %v38
    %1467 = vmatprep.subr.mxu0 0.0
    %1468 = vmatpush2.msra.mxu0 0.0
    %1469 = vmatprep.subr.mxu0 0.0
    %1470 = vmatpush2.msra.mxu0 0.0
    %1471 = vmatprep.subr.mxu0 0.0
    %1472 = vmatpush2.msra.mxu0 0.0
    %1473 = vmatprep.subr.mxu0 0.0
    %1474 = vmatpush2.msra.mxu0 0.0
    %1475 = vmatprep.subr.mxu0 0.0
    %1476 = vmatpush2.msra.mxu0 0.0
    %1477 = vmatprep.subr.mxu0 0.0
    %1478 = vmatpush2.msra.mxu0 0.0
    %1479 = vmatprep.subr.mxu0 0.0
    %1480 = vmatpush2.msra.mxu0 0.0
    %1481 = vmatprep.subr.mxu0 0.0
    %1482 = vmatpush2.msra.mxu0 0.0
    %1483 = vmatprep.subr.mxu0 0.0
    %1484 = vmatpush2.msra.mxu0 0.0
    %1485 = vmatprep.subr.mxu0 0.0
    %1486 = vmatpush2.msra.mxu0 0.0
    %1487 = vmatprep.subr.mxu0 0.0
    %1488 = vmatpush2.msra.mxu0 0.0
    %1489 = vmatprep.subr.mxu0 0.0
    %1490 = vmatpush2.msra.mxu0 0.0
    %1491 = vmatprep.subr.mxu0 0.0
    %1492 = vmatpush2.msra.mxu0 0.0
    %1493 = vmatprep.subr.mxu0 0.0
    %1494 = vmatpush2.msra.mxu0 0.0
    %1495 = vmatprep.subr.mxu0 0.0
    %1496 = vmatpush2.msra.mxu0 0.0
    %1497 = vmatprep.subr.mxu0 0.0
    %1498 = vmatpush2.msra.mxu0 0.0
    %1499 = vmatprep.mubr.f32.mxu0 0.0
    %1500 = vmatmul.mubr.f32.gmra.mxu0 %v1433
    %v1501 = vpop.f32.mrf.mxu0
    %v1502 = vadd.f32 0.0, %v1501
    %v1503 = vpop.f32.mrf.mxu0
    %1504 = vdwg.mxu0
    %v1505 = vadd.f32 %v1350, %v1502
    %1506 = vrot.lane.b32.xlu0 %v286, 104
    %v1507 = vpop.permute.xlu0 %1506
    %1508 = vrot.lane.b32.xlu0 %v291, 104
    %v1509 = vpop.permute.xlu0 %1508
    %v1513 = vsel %vm963, %v1047, 0
    %1515 = vmatprep.subr.mxu0 0.0
    %1516 = vmatpush1.msra.mxu0 0.0
    %1517 = vmatprep.subr.mxu0 0.0
    %1518 = vmatpush1.msra.mxu0 0.0
    %1519 = vmatprep.subr.mxu0 0.0
    %1520 = vmatpush1.msra.mxu0 0.0
    %1521 = vmatprep.subr.mxu0 0.0
    %1522 = vmatpush1.msra.mxu0 0.0
    %1523 = vmatprep.subr.mxu0 0.0
    %1524 = vmatpush1.msra.mxu0 0.0
    %1525 = vmatprep.subr.mxu0 0.0
    %1526 = vmatpush1.msra.mxu0 0.0
    %1527 = vmatprep.subr.mxu0 0.0
    %1528 = vmatpush1.msra.mxu0 0.0
    %1529 = vmatprep.subr.mxu0 0.0
    %1530 = vmatpush1.msra.mxu0 0.0
    %1531 = vmatprep.subr.mxu0 0.0
    %1532 = vmatpush1.msra.mxu0 0.0
    %1533 = vmatprep.subr.mxu0 0.0
    %1534 = vmatpush1.msra.mxu0 0.0
    %1535 = vmatprep.subr.mxu0 0.0
    %1536 = vmatpush1.msra.mxu0 0.0
    %1537 = vmatprep.subr.mxu0 0.0
    %1538 = vmatpush1.msra.mxu0 0.0
    %1539 = vmatprep.subr.mxu0 0.0
    %1540 = vmatpush1.msra.mxu0 0.0
    %1541 = vmatprep.subr.mxu0 0.0
    %1542 = vmatpush1.msra.mxu0 0.0
    %1543 = vmatprep.subr.mxu0 0.0
    %1544 = vmatpush1.msra.mxu0 %v1509
    %1545 = vmatprep.subr.mxu0 0.0
    %1546 = vmatpush1.msra.mxu0 %v1507
    %1547 = vmatprep.subr.mxu0 0.0
    %1548 = vmatpush2.msra.mxu0 0.0
    %1549 = vmatprep.subr.mxu0 0.0
    %1550 = vmatpush2.msra.mxu0 0.0
    %1551 = vmatprep.subr.mxu0 0.0
    %1552 = vmatpush2.msra.mxu0 0.0
    %1553 = vmatprep.subr.mxu0 0.0
    %1554 = vmatpush2.msra.mxu0 0.0
    %1555 = vmatprep.subr.mxu0 0.0
    %1556 = vmatpush2.msra.mxu0 0.0
    %1557 = vmatprep.subr.mxu0 0.0
    %1558 = vmatpush2.msra.mxu0 0.0
    %1559 = vmatprep.subr.mxu0 0.0
    %1560 = vmatpush2.msra.mxu0 0.0
    %1561 = vmatprep.subr.mxu0 0.0
    %1562 = vmatpush2.msra.mxu0 0.0
    %1563 = vmatprep.subr.mxu0 0.0
    %1564 = vmatpush2.msra.mxu0 0.0
    %1565 = vmatprep.subr.mxu0 0.0
    %1566 = vmatpush2.msra.mxu0 0.0
    %1567 = vmatprep.subr.mxu0 0.0
    %1568 = vmatpush2.msra.mxu0 0.0
    %1569 = vmatprep.subr.mxu0 0.0
    %1570 = vmatpush2.msra.mxu0 0.0
    %1571 = vmatprep.subr.mxu0 0.0
    %1572 = vmatpush2.msra.mxu0 0.0
    %1573 = vmatprep.subr.mxu0 0.0
    %1574 = vmatpush2.msra.mxu0 0.0
    %1575 = vmatprep.subr.mxu0 0.0
    %1576 = vmatpush2.msra.mxu0 0.0
    %1577 = vmatprep.subr.mxu0 0.0
    %1578 = vmatpush2.msra.mxu0 0.0
    %1579 = vmatprep.mubr.f32.mxu0 0.0
    %1580 = vmatmul.mubr.f32.gmra.mxu0 %v1513
    %v1581 = vpop.f32.mrf.mxu0
    %v1582 = vadd.f32 0.0, %v1581
    %v1583 = vpop.f32.mrf.mxu0
    %1584 = vdwg.mxu0
    %v1586 = vsel %vm304, %v1582, 0
    %1588 = vmatprep.subr.mxu0 0.0
    %1589 = vmatpush1.msra.mxu0 0.0
    %1590 = vmatprep.subr.mxu0 0.0
    %1591 = vmatpush1.msra.mxu0 0.0
    %1592 = vmatprep.subr.mxu0 0.0
    %1593 = vmatpush1.msra.mxu0 0.0
    %1594 = vmatprep.subr.mxu0 0.0
    %1595 = vmatpush1.msra.mxu0 0.0
    %1596 = vmatprep.subr.mxu0 0.0
    %1597 = vmatpush1.msra.mxu0 0.0
    %1598 = vmatprep.subr.mxu0 0.0
    %1599 = vmatpush1.msra.mxu0 0.0
    %1600 = vmatprep.subr.mxu0 0.0
    %1601 = vmatpush1.msra.mxu0 0.0
    %1602 = vmatprep.subr.mxu0 0.0
    %1603 = vmatpush1.msra.mxu0 0.0
    %1604 = vmatprep.subr.mxu0 0.0
    %1605 = vmatpush1.msra.mxu0 0.0
    %1606 = vmatprep.subr.mxu0 0.0
    %1607 = vmatpush1.msra.mxu0 0.0
    %1608 = vmatprep.subr.mxu0 0.0
    %1609 = vmatpush1.msra.mxu0 0.0
    %1610 = vmatprep.subr.mxu0 0.0
    %1611 = vmatpush1.msra.mxu0 0.0
    %1612 = vmatprep.subr.mxu0 0.0
    %1613 = vmatpush1.msra.mxu0 0.0
    %1614 = vmatprep.subr.mxu0 0.0
    %1615 = vmatpush1.msra.mxu0 0.0
    %1616 = vmatprep.subr.mxu0 0.0
    %1617 = vmatpush1.msra.mxu0 0.0
    %1618 = vmatprep.subr.mxu0 0.0
    %1619 = vmatpush1.msra.mxu0 %v39
    %1620 = vmatprep.subr.mxu0 0.0
    %1621 = vmatpush2.msra.mxu0 0.0
    %1622 = vmatprep.subr.mxu0 0.0
    %1623 = vmatpush2.msra.mxu0 0.0
    %1624 = vmatprep.subr.mxu0 0.0
    %1625 = vmatpush2.msra.mxu0 0.0
    %1626 = vmatprep.subr.mxu0 0.0
    %1627 = vmatpush2.msra.mxu0 0.0
    %1628 = vmatprep.subr.mxu0 0.0
    %1629 = vmatpush2.msra.mxu0 0.0
    %1630 = vmatprep.subr.mxu0 0.0
    %1631 = vmatpush2.msra.mxu0 0.0
    %1632 = vmatprep.subr.mxu0 0.0
    %1633 = vmatpush2.msra.mxu0 0.0
    %1634 = vmatprep.subr.mxu0 0.0
    %1635 = vmatpush2.msra.mxu0 0.0
    %1636 = vmatprep.subr.mxu0 0.0
    %1637 = vmatpush2.msra.mxu0 0.0
    %1638 = vmatprep.subr.mxu0 0.0
    %1639 = vmatpush2.msra.mxu0 0.0
    %1640 = vmatprep.subr.mxu0 0.0
    %1641 = vmatpush2.msra.mxu0 0.0
    %1642 = vmatprep.subr.mxu0 0.0
    %1643 = vmatpush2.msra.mxu0 0.0
    %1644 = vmatprep.subr.mxu0 0.0
    %1645 = vmatpush2.msra.mxu0 0.0
    %1646 = vmatprep.subr.mxu0 0.0
    %1647 = vmatpush2.msra.mxu0 0.0
    %1648 = vmatprep.subr.mxu0 0.0
    %1649 = vmatpush2.msra.mxu0 0.0
    %1650 = vmatprep.subr.mxu0 0.0
    %1651 = vmatpush2.msra.mxu0 0.0
    %1652 = vmatprep.mubr.f32.mxu0 0.0
    %1653 = vmatmul.mubr.f32.gmra.mxu0 %v1586
    %v1654 = vpop.f32.mrf.mxu0
    %v1655 = vadd.f32 0.0, %v1654
    %v1656 = vpop.f32.mrf.mxu0
    %1657 = vdwg.mxu0
    %v1658 = vadd.f32 %v1505, %v1655
    %v1660 = vlaneseq
    %v1661 = vshrl.u32 %v1660, 7
    %v1662 = vsub.s32 0, %v1661
    %v1663 = vrot.slane %v1052, %v1662
    %v1665 = vadd.f32 %v1658, %v1663
    %1666 = vst.msk [vmem:[#allocation2] sm:$0xff] %vm40, %v1665
    %v1668 = vsel %vm963, %v1048, 0
    %1670 = vmatprep.subr.mxu0 0.0
    %1671 = vmatpush1.msra.mxu0 0.0
    %1672 = vmatprep.subr.mxu0 0.0
    %1673 = vmatpush1.msra.mxu0 0.0
    %1674 = vmatprep.subr.mxu0 0.0
    %1675 = vmatpush1.msra.mxu0 0.0
    %1676 = vmatprep.subr.mxu0 0.0
    %1677 = vmatpush1.msra.mxu0 0.0
    %1678 = vmatprep.subr.mxu0 0.0
    %1679 = vmatpush1.msra.mxu0 0.0
    %1680 = vmatprep.subr.mxu0 0.0
    %1681 = vmatpush1.msra.mxu0 0.0
    %1682 = vmatprep.subr.mxu0 0.0
    %1683 = vmatpush1.msra.mxu0 0.0
    %1684 = vmatprep.subr.mxu0 0.0
    %1685 = vmatpush1.msra.mxu0 0.0
    %1686 = vmatprep.subr.mxu0 0.0
    %1687 = vmatpush1.msra.mxu0 0.0
    %1688 = vmatprep.subr.mxu0 0.0
    %1689 = vmatpush1.msra.mxu0 0.0
    %1690 = vmatprep.subr.mxu0 0.0
    %1691 = vmatpush1.msra.mxu0 0.0
    %1692 = vmatprep.subr.mxu0 0.0
    %1693 = vmatpush1.msra.mxu0 0.0
    %1694 = vmatprep.subr.mxu0 0.0
    %1695 = vmatpush1.msra.mxu0 0.0
    %1696 = vmatprep.subr.mxu0 0.0
    %1697 = vmatpush1.msra.mxu0 0.0
    %1698 = vmatprep.subr.mxu0 0.0
    %1699 = vmatpush1.msra.mxu0 %v301
    %1700 = vmatprep.subr.mxu0 0.0
    %1701 = vmatpush1.msra.mxu0 %v296
    %1702 = vmatprep.subr.mxu0 0.0
    %1703 = vmatpush2.msra.mxu0 0.0
    %1704 = vmatprep.subr.mxu0 0.0
    %1705 = vmatpush2.msra.mxu0 0.0
    %1706 = vmatprep.subr.mxu0 0.0
    %1707 = vmatpush2.msra.mxu0 0.0
    %1708 = vmatprep.subr.mxu0 0.0
    %1709 = vmatpush2.msra.mxu0 0.0
    %1710 = vmatprep.subr.mxu0 0.0
    %1711 = vmatpush2.msra.mxu0 0.0
    %1712 = vmatprep.subr.mxu0 0.0
    %1713 = vmatpush2.msra.mxu0 0.0
    %1714 = vmatprep.subr.mxu0 0.0
    %1715 = vmatpush2.msra.mxu0 0.0
    %1716 = vmatprep.subr.mxu0 0.0
    %1717 = vmatpush2.msra.mxu0 0.0
    %1718 = vmatprep.subr.mxu0 0.0
    %1719 = vmatpush2.msra.mxu0 0.0
    %1720 = vmatprep.subr.mxu0 0.0
    %1721 = vmatpush2.msra.mxu0 0.0
    %1722 = vmatprep.subr.mxu0 0.0
    %1723 = vmatpush2.msra.mxu0 0.0
    %1724 = vmatprep.subr.mxu0 0.0
    %1725 = vmatpush2.msra.mxu0 0.0
    %1726 = vmatprep.subr.mxu0 0.0
    %1727 = vmatpush2.msra.mxu0 0.0
    %1728 = vmatprep.subr.mxu0 0.0
    %1729 = vmatpush2.msra.mxu0 0.0
    %1730 = vmatprep.subr.mxu0 0.0
    %1731 = vmatpush2.msra.mxu0 0.0
    %1732 = vmatprep.subr.mxu0 0.0
    %1733 = vmatpush2.msra.mxu0 0.0
    %1734 = vmatprep.mubr.f32.mxu0 0.0
    %1735 = vmatmul.mubr.f32.gmra.mxu0 %v1668
    %v1736 = vpop.f32.mrf.mxu0
    %v1737 = vadd.f32 0.0, %v1736
    %v1738 = vpop.f32.mrf.mxu0
    %1739 = vdwg.mxu0
    %1742 = vrot.lane.b32.xlu0 %v296, 120
    %v1743 = vpop.permute.xlu0 %1742
    %1744 = vrot.lane.b32.xlu0 %v301, 120
    %v1745 = vpop.permute.xlu0 %1744
    %v1749 = vsel %vm963, %v1049, 0
    %1751 = vmatprep.subr.mxu0 0.0
    %1752 = vmatpush1.msra.mxu0 0.0
    %1753 = vmatprep.subr.mxu0 0.0
    %1754 = vmatpush1.msra.mxu0 0.0
    %1755 = vmatprep.subr.mxu0 0.0
    %1756 = vmatpush1.msra.mxu0 0.0
    %1757 = vmatprep.subr.mxu0 0.0
    %1758 = vmatpush1.msra.mxu0 0.0
    %1759 = vmatprep.subr.mxu0 0.0
    %1760 = vmatpush1.msra.mxu0 0.0
    %1761 = vmatprep.subr.mxu0 0.0
    %1762 = vmatpush1.msra.mxu0 0.0
    %1763 = vmatprep.subr.mxu0 0.0
    %1764 = vmatpush1.msra.mxu0 0.0
    %1765 = vmatprep.subr.mxu0 0.0
    %1766 = vmatpush1.msra.mxu0 0.0
    %1767 = vmatprep.subr.mxu0 0.0
    %1768 = vmatpush1.msra.mxu0 0.0
    %1769 = vmatprep.subr.mxu0 0.0
    %1770 = vmatpush1.msra.mxu0 0.0
    %1771 = vmatprep.subr.mxu0 0.0
    %1772 = vmatpush1.msra.mxu0 0.0
    %1773 = vmatprep.subr.mxu0 0.0
    %1774 = vmatpush1.msra.mxu0 0.0
    %1775 = vmatprep.subr.mxu0 0.0
    %1776 = vmatpush1.msra.mxu0 0.0
    %1777 = vmatprep.subr.mxu0 0.0
    %1778 = vmatpush1.msra.mxu0 0.0
    %1779 = vmatprep.subr.mxu0 0.0
    %1780 = vmatpush1.msra.mxu0 %v1745
    %1781 = vmatprep.subr.mxu0 0.0
    %1782 = vmatpush1.msra.mxu0 %v1743
    %1783 = vmatprep.subr.mxu0 0.0
    %1784 = vmatpush2.msra.mxu0 0.0
    %1785 = vmatprep.subr.mxu0 0.0
    %1786 = vmatpush2.msra.mxu0 0.0
    %1787 = vmatprep.subr.mxu0 0.0
    %1788 = vmatpush2.msra.mxu0 0.0
    %1789 = vmatprep.subr.mxu0 0.0
    %1790 = vmatpush2.msra.mxu0 0.0
    %1791 = vmatprep.subr.mxu0 0.0
    %1792 = vmatpush2.msra.mxu0 0.0
    %1793 = vmatprep.subr.mxu0 0.0
    %1794 = vmatpush2.msra.mxu0 0.0
    %1795 = vmatprep.subr.mxu0 0.0
    %1796 = vmatpush2.msra.mxu0 0.0
    %1797 = vmatprep.subr.mxu0 0.0
    %1798 = vmatpush2.msra.mxu0 0.0
    %1799 = vmatprep.subr.mxu0 0.0
    %1800 = vmatpush2.msra.mxu0 0.0
    %1801 = vmatprep.subr.mxu0 0.0
    %1802 = vmatpush2.msra.mxu0 0.0
    %1803 = vmatprep.subr.mxu0 0.0
    %1804 = vmatpush2.msra.mxu0 0.0
    %1805 = vmatprep.subr.mxu0 0.0
    %1806 = vmatpush2.msra.mxu0 0.0
    %1807 = vmatprep.subr.mxu0 0.0
    %1808 = vmatpush2.msra.mxu0 0.0
    %1809 = vmatprep.subr.mxu0 0.0
    %1810 = vmatpush2.msra.mxu0 0.0
    %1811 = vmatprep.subr.mxu0 0.0
    %1812 = vmatpush2.msra.mxu0 0.0
    %1813 = vmatprep.subr.mxu0 0.0
    %1814 = vmatpush2.msra.mxu0 0.0
    %1815 = vmatprep.mubr.f32.mxu0 0.0
    %1816 = vmatmul.mubr.f32.gmra.mxu0 %v1749
    %v1817 = vpop.f32.mrf.mxu0
    %v1818 = vadd.f32 0.0, %v1817
    %v1819 = vpop.f32.mrf.mxu0
    %1820 = vdwg.mxu0
    %v1822 = vsel %vm304, %v1818, 0
    %1824 = vmatprep.subr.mxu0 0.0
    %1825 = vmatpush1.msra.mxu0 0.0
    %1826 = vmatprep.subr.mxu0 0.0
    %1827 = vmatpush1.msra.mxu0 0.0
    %1828 = vmatprep.subr.mxu0 0.0
    %1829 = vmatpush1.msra.mxu0 0.0
    %1830 = vmatprep.subr.mxu0 0.0
    %1831 = vmatpush1.msra.mxu0 0.0
    %1832 = vmatprep.subr.mxu0 0.0
    %1833 = vmatpush1.msra.mxu0 0.0
    %1834 = vmatprep.subr.mxu0 0.0
    %1835 = vmatpush1.msra.mxu0 0.0
    %1836 = vmatprep.subr.mxu0 0.0
    %1837 = vmatpush1.msra.mxu0 0.0
    %1838 = vmatprep.subr.mxu0 0.0
    %1839 = vmatpush1.msra.mxu0 0.0
    %1840 = vmatprep.subr.mxu0 0.0
    %1841 = vmatpush1.msra.mxu0 0.0
    %1842 = vmatprep.subr.mxu0 0.0
    %1843 = vmatpush1.msra.mxu0 0.0
    %1844 = vmatprep.subr.mxu0 0.0
    %1845 = vmatpush1.msra.mxu0 0.0
    %1846 = vmatprep.subr.mxu0 0.0
    %1847 = vmatpush1.msra.mxu0 0.0
    %1848 = vmatprep.subr.mxu0 0.0
    %1849 = vmatpush1.msra.mxu0 0.0
    %1850 = vmatprep.subr.mxu0 0.0
    %1851 = vmatpush1.msra.mxu0 0.0
    %1852 = vmatprep.subr.mxu0 0.0
    %1853 = vmatpush1.msra.mxu0 0.0
    %1854 = vmatprep.subr.mxu0 0.0
    %1855 = vmatpush1.msra.mxu0 %v37
    %1856 = vmatprep.subr.mxu0 0.0
    %1857 = vmatpush2.msra.mxu0 0.0
    %1858 = vmatprep.subr.mxu0 0.0
    %1859 = vmatpush2.msra.mxu0 0.0
    %1860 = vmatprep.subr.mxu0 0.0
    %1861 = vmatpush2.msra.mxu0 0.0
    %1862 = vmatprep.subr.mxu0 0.0
    %1863 = vmatpush2.msra.mxu0 0.0
    %1864 = vmatprep.subr.mxu0 0.0
    %1865 = vmatpush2.msra.mxu0 0.0
    %1866 = vmatprep.subr.mxu0 0.0
    %1867 = vmatpush2.msra.mxu0 0.0
    %1868 = vmatprep.subr.mxu0 0.0
    %1869 = vmatpush2.msra.mxu0 0.0
    %1870 = vmatprep.subr.mxu0 0.0
    %1871 = vmatpush2.msra.mxu0 0.0
    %1872 = vmatprep.subr.mxu0 0.0
    %1873 = vmatpush2.msra.mxu0 0.0
    %1874 = vmatprep.subr.mxu0 0.0
    %1875 = vmatpush2.msra.mxu0 0.0
    %1876 = vmatprep.subr.mxu0 0.0
    %1877 = vmatpush2.msra.mxu0 0.0
    %1878 = vmatprep.subr.mxu0 0.0
    %1879 = vmatpush2.msra.mxu0 0.0
    %1880 = vmatprep.subr.mxu0 0.0
    %1881 = vmatpush2.msra.mxu0 0.0
    %1882 = vmatprep.subr.mxu0 0.0
    %1883 = vmatpush2.msra.mxu0 0.0
    %1884 = vmatprep.subr.mxu0 0.0
    %1885 = vmatpush2.msra.mxu0 0.0
    %1886 = vmatprep.subr.mxu0 0.0
    %1887 = vmatpush2.msra.mxu0 0.0
    %1888 = vmatprep.mubr.f32.mxu0 0.0
    %1889 = vmatmul.mubr.f32.gmra.mxu0 %v1822
    %v1890 = vpop.f32.mrf.mxu0
    %v1891 = vadd.f32 0.0, %v1890
    %v1892 = vpop.f32.mrf.mxu0
    %1893 = vdwg.mxu0
    %v1895 = vsel %vm304, %v1737, 0
    %1897 = vmatprep.subr.mxu0 0.0
    %1898 = vmatpush1.msra.mxu0 0.0
    %1899 = vmatprep.subr.mxu0 0.0
    %1900 = vmatpush1.msra.mxu0 0.0
    %1901 = vmatprep.subr.mxu0 0.0
    %1902 = vmatpush1.msra.mxu0 0.0
    %1903 = vmatprep.subr.mxu0 0.0
    %1904 = vmatpush1.msra.mxu0 0.0
    %1905 = vmatprep.subr.mxu0 0.0
    %1906 = vmatpush1.msra.mxu0 0.0
    %1907 = vmatprep.subr.mxu0 0.0
    %1908 = vmatpush1.msra.mxu0 0.0
    %1909 = vmatprep.subr.mxu0 0.0
    %1910 = vmatpush1.msra.mxu0 0.0
    %1911 = vmatprep.subr.mxu0 0.0
    %1912 = vmatpush1.msra.mxu0 0.0
    %1913 = vmatprep.subr.mxu0 0.0
    %1914 = vmatpush1.msra.mxu0 0.0
    %1915 = vmatprep.subr.mxu0 0.0
    %1916 = vmatpush1.msra.mxu0 0.0
    %1917 = vmatprep.subr.mxu0 0.0
    %1918 = vmatpush1.msra.mxu0 0.0
    %1919 = vmatprep.subr.mxu0 0.0
    %1920 = vmatpush1.msra.mxu0 0.0
    %1921 = vmatprep.subr.mxu0 0.0
    %1922 = vmatpush1.msra.mxu0 0.0
    %1923 = vmatprep.subr.mxu0 0.0
    %1924 = vmatpush1.msra.mxu0 0.0
    %1925 = vmatprep.subr.mxu0 0.0
    %1926 = vmatpush1.msra.mxu0 0.0
    %1927 = vmatprep.subr.mxu0 0.0
    %1928 = vmatpush1.msra.mxu0 %v36
    %1929 = vmatprep.subr.mxu0 0.0
    %1930 = vmatpush2.msra.mxu0 0.0
    %1931 = vmatprep.subr.mxu0 0.0
    %1932 = vmatpush2.msra.mxu0 0.0
    %1933 = vmatprep.subr.mxu0 0.0
    %1934 = vmatpush2.msra.mxu0 0.0
    %1935 = vmatprep.subr.mxu0 0.0
    %1936 = vmatpush2.msra.mxu0 0.0
    %1937 = vmatprep.subr.mxu0 0.0
    %1938 = vmatpush2.msra.mxu0 0.0
    %1939 = vmatprep.subr.mxu0 0.0
    %1940 = vmatpush2.msra.mxu0 0.0
    %1941 = vmatprep.subr.mxu0 0.0
    %1942 = vmatpush2.msra.mxu0 0.0
    %1943 = vmatprep.subr.mxu0 0.0
    %1944 = vmatpush2.msra.mxu0 0.0
    %1945 = vmatprep.subr.mxu0 0.0
    %1946 = vmatpush2.msra.mxu0 0.0
    %1947 = vmatprep.subr.mxu0 0.0
    %1948 = vmatpush2.msra.mxu0 0.0
    %1949 = vmatprep.subr.mxu0 0.0
    %1950 = vmatpush2.msra.mxu0 0.0
    %1951 = vmatprep.subr.mxu0 0.0
    %1952 = vmatpush2.msra.mxu0 0.0
    %1953 = vmatprep.subr.mxu0 0.0
    %1954 = vmatpush2.msra.mxu0 0.0
    %1955 = vmatprep.subr.mxu0 0.0
    %1956 = vmatpush2.msra.mxu0 0.0
    %1957 = vmatprep.subr.mxu0 0.0
    %1958 = vmatpush2.msra.mxu0 0.0
    %1959 = vmatprep.subr.mxu0 0.0
    %1960 = vmatpush2.msra.mxu0 0.0
    %1961 = vmatprep.mubr.f32.mxu0 0.0
    %1962 = vmatmul.mubr.f32.gmra.mxu0 %v1895
    %v1963 = vpop.f32.mrf.mxu0
    %v1964 = vadd.f32 %v1891, %v1963
    %v1965 = vpop.f32.mrf.mxu0
    %1966 = vdwg.mxu0
    %1967 = vrot.lane.b32.xlu0 %v296, 112
    %v1968 = vpop.permute.xlu0 %1967
    %1969 = vrot.lane.b32.xlu0 %v301, 112
    %v1970 = vpop.permute.xlu0 %1969
    %v1974 = vsel %vm963, %v1050, 0
    %1976 = vmatprep.subr.mxu0 0.0
    %1977 = vmatpush1.msra.mxu0 0.0
    %1978 = vmatprep.subr.mxu0 0.0
    %1979 = vmatpush1.msra.mxu0 0.0
    %1980 = vmatprep.subr.mxu0 0.0
    %1981 = vmatpush1.msra.mxu0 0.0
    %1982 = vmatprep.subr.mxu0 0.0
    %1983 = vmatpush1.msra.mxu0 0.0
    %1984 = vmatprep.subr.mxu0 0.0
    %1985 = vmatpush1.msra.mxu0 0.0
    %1986 = vmatprep.subr.mxu0 0.0
    %1987 = vmatpush1.msra.mxu0 0.0
    %1988 = vmatprep.subr.mxu0 0.0
    %1989 = vmatpush1.msra.mxu0 0.0
    %1990 = vmatprep.subr.mxu0 0.0
    %1991 = vmatpush1.msra.mxu0 0.0
    %1992 = vmatprep.subr.mxu0 0.0
    %1993 = vmatpush1.msra.mxu0 0.0
    %1994 = vmatprep.subr.mxu0 0.0
    %1995 = vmatpush1.msra.mxu0 0.0
    %1996 = vmatprep.subr.mxu0 0.0
    %1997 = vmatpush1.msra.mxu0 0.0
    %1998 = vmatprep.subr.mxu0 0.0
    %1999 = vmatpush1.msra.mxu0 0.0
    %2000 = vmatprep.subr.mxu0 0.0
    %2001 = vmatpush1.msra.mxu0 0.0
    %2002 = vmatprep.subr.mxu0 0.0
    %2003 = vmatpush1.msra.mxu0 0.0
    %2004 = vmatprep.subr.mxu0 0.0
    %2005 = vmatpush1.msra.mxu0 %v1970
    %2006 = vmatprep.subr.mxu0 0.0
    %2007 = vmatpush1.msra.mxu0 %v1968
    %2008 = vmatprep.subr.mxu0 0.0
    %2009 = vmatpush2.msra.mxu0 0.0
    %2010 = vmatprep.subr.mxu0 0.0
    %2011 = vmatpush2.msra.mxu0 0.0
    %2012 = vmatprep.subr.mxu0 0.0
    %2013 = vmatpush2.msra.mxu0 0.0
    %2014 = vmatprep.subr.mxu0 0.0
    %2015 = vmatpush2.msra.mxu0 0.0
    %2016 = vmatprep.subr.mxu0 0.0
    %2017 = vmatpush2.msra.mxu0 0.0
    %2018 = vmatprep.subr.mxu0 0.0
    %2019 = vmatpush2.msra.mxu0 0.0
    %2020 = vmatprep.subr.mxu0 0.0
    %2021 = vmatpush2.msra.mxu0 0.0
    %2022 = vmatprep.subr.mxu0 0.0
    %2023 = vmatpush2.msra.mxu0 0.0
    %2024 = vmatprep.subr.mxu0 0.0
    %2025 = vmatpush2.msra.mxu0 0.0
    %2026 = vmatprep.subr.mxu0 0.0
    %2027 = vmatpush2.msra.mxu0 0.0
    %2028 = vmatprep.subr.mxu0 0.0
    %2029 = vmatpush2.msra.mxu0 0.0
    %2030 = vmatprep.subr.mxu0 0.0
    %2031 = vmatpush2.msra.mxu0 0.0
    %2032 = vmatprep.subr.mxu0 0.0
    %2033 = vmatpush2.msra.mxu0 0.0
    %2034 = vmatprep.subr.mxu0 0.0
    %2035 = vmatpush2.msra.mxu0 0.0
    %2036 = vmatprep.subr.mxu0 0.0
    %2037 = vmatpush2.msra.mxu0 0.0
    %2038 = vmatprep.subr.mxu0 0.0
    %2039 = vmatpush2.msra.mxu0 0.0
    %2040 = vmatprep.mubr.f32.mxu0 0.0
    %2041 = vmatmul.mubr.f32.gmra.mxu0 %v1974
    %v2042 = vpop.f32.mrf.mxu0
    %v2043 = vadd.f32 0.0, %v2042
    %v2044 = vpop.f32.mrf.mxu0
    %2045 = vdwg.mxu0
    %v2047 = vsel %vm304, %v2043, 0
    %2049 = vmatprep.subr.mxu0 0.0
    %2050 = vmatpush1.msra.mxu0 0.0
    %2051 = vmatprep.subr.mxu0 0.0
    %2052 = vmatpush1.msra.mxu0 0.0
    %2053 = vmatprep.subr.mxu0 0.0
    %2054 = vmatpush1.msra.mxu0 0.0
    %2055 = vmatprep.subr.mxu0 0.0
    %2056 = vmatpush1.msra.mxu0 0.0
    %2057 = vmatprep.subr.mxu0 0.0
    %2058 = vmatpush1.msra.mxu0 0.0
    %2059 = vmatprep.subr.mxu0 0.0
    %2060 = vmatpush1.msra.mxu0 0.0
    %2061 = vmatprep.subr.mxu0 0.0
    %2062 = vmatpush1.msra.mxu0 0.0
    %2063 = vmatprep.subr.mxu0 0.0
    %2064 = vmatpush1.msra.mxu0 0.0
    %2065 = vmatprep.subr.mxu0 0.0
    %2066 = vmatpush1.msra.mxu0 0.0
    %2067 = vmatprep.subr.mxu0 0.0
    %2068 = vmatpush1.msra.mxu0 0.0
    %2069 = vmatprep.subr.mxu0 0.0
    %2070 = vmatpush1.msra.mxu0 0.0
    %2071 = vmatprep.subr.mxu0 0.0
    %2072 = vmatpush1.msra.mxu0 0.0
    %2073 = vmatprep.subr.mxu0 0.0
    %2074 = vmatpush1.msra.mxu0 0.0
    %2075 = vmatprep.subr.mxu0 0.0
    %2076 = vmatpush1.msra.mxu0 0.0
    %2077 = vmatprep.subr.mxu0 0.0
    %2078 = vmatpush1.msra.mxu0 0.0
    %2079 = vmatprep.subr.mxu0 0.0
    %2080 = vmatpush1.msra.mxu0 %v38
    %2081 = vmatprep.subr.mxu0 0.0
    %2082 = vmatpush2.msra.mxu0 0.0
    %2083 = vmatprep.subr.mxu0 0.0
    %2084 = vmatpush2.msra.mxu0 0.0
    %2085 = vmatprep.subr.mxu0 0.0
    %2086 = vmatpush2.msra.mxu0 0.0
    %2087 = vmatprep.subr.mxu0 0.0
    %2088 = vmatpush2.msra.mxu0 0.0
    %2089 = vmatprep.subr.mxu0 0.0
    %2090 = vmatpush2.msra.mxu0 0.0
    %2091 = vmatprep.subr.mxu0 0.0
    %2092 = vmatpush2.msra.mxu0 0.0
    %2093 = vmatprep.subr.mxu0 0.0
    %2094 = vmatpush2.msra.mxu0 0.0
    %2095 = vmatprep.subr.mxu0 0.0
    %2096 = vmatpush2.msra.mxu0 0.0
    %2097 = vmatprep.subr.mxu0 0.0
    %2098 = vmatpush2.msra.mxu0 0.0
    %2099 = vmatprep.subr.mxu0 0.0
    %2100 = vmatpush2.msra.mxu0 0.0
    %2101 = vmatprep.subr.mxu0 0.0
    %2102 = vmatpush2.msra.mxu0 0.0
    %2103 = vmatprep.subr.mxu0 0.0
    %2104 = vmatpush2.msra.mxu0 0.0
    %2105 = vmatprep.subr.mxu0 0.0
    %2106 = vmatpush2.msra.mxu0 0.0
    %2107 = vmatprep.subr.mxu0 0.0
    %2108 = vmatpush2.msra.mxu0 0.0
    %2109 = vmatprep.subr.mxu0 0.0
    %2110 = vmatpush2.msra.mxu0 0.0
    %2111 = vmatprep.subr.mxu0 0.0
    %2112 = vmatpush2.msra.mxu0 0.0
    %2113 = vmatprep.mubr.f32.mxu0 0.0
    %2114 = vmatmul.mubr.f32.gmra.mxu0 %v2047
    %v2115 = vpop.f32.mrf.mxu0
    %v2116 = vadd.f32 0.0, %v2115
    %v2117 = vpop.f32.mrf.mxu0
    %2118 = vdwg.mxu0
    %v2119 = vadd.f32 %v1964, %v2116
    %2120 = vrot.lane.b32.xlu0 %v296, 104
    %v2121 = vpop.permute.xlu0 %2120
    %2122 = vrot.lane.b32.xlu0 %v301, 104
    %v2123 = vpop.permute.xlu0 %2122
    %v2127 = vsel %vm963, %v1051, 0
    %2129 = vmatprep.subr.mxu0 0.0
    %2130 = vmatpush1.msra.mxu0 0.0
    %2131 = vmatprep.subr.mxu0 0.0
    %2132 = vmatpush1.msra.mxu0 0.0
    %2133 = vmatprep.subr.mxu0 0.0
    %2134 = vmatpush1.msra.mxu0 0.0
    %2135 = vmatprep.subr.mxu0 0.0
    %2136 = vmatpush1.msra.mxu0 0.0
    %2137 = vmatprep.subr.mxu0 0.0
    %2138 = vmatpush1.msra.mxu0 0.0
    %2139 = vmatprep.subr.mxu0 0.0
    %2140 = vmatpush1.msra.mxu0 0.0
    %2141 = vmatprep.subr.mxu0 0.0
    %2142 = vmatpush1.msra.mxu0 0.0
    %2143 = vmatprep.subr.mxu0 0.0
    %2144 = vmatpush1.msra.mxu0 0.0
    %2145 = vmatprep.subr.mxu0 0.0
    %2146 = vmatpush1.msra.mxu0 0.0
    %2147 = vmatprep.subr.mxu0 0.0
    %2148 = vmatpush1.msra.mxu0 0.0
    %2149 = vmatprep.subr.mxu0 0.0
    %2150 = vmatpush1.msra.mxu0 0.0
    %2151 = vmatprep.subr.mxu0 0.0
    %2152 = vmatpush1.msra.mxu0 0.0
    %2153 = vmatprep.subr.mxu0 0.0
    %2154 = vmatpush1.msra.mxu0 0.0
    %2155 = vmatprep.subr.mxu0 0.0
    %2156 = vmatpush1.msra.mxu0 0.0
    %2157 = vmatprep.subr.mxu0 0.0
    %2158 = vmatpush1.msra.mxu0 %v2123
    %2159 = vmatprep.subr.mxu0 0.0
    %2160 = vmatpush1.msra.mxu0 %v2121
    %2161 = vmatprep.subr.mxu0 0.0
    %2162 = vmatpush2.msra.mxu0 0.0
    %2163 = vmatprep.subr.mxu0 0.0
    %2164 = vmatpush2.msra.mxu0 0.0
    %2165 = vmatprep.subr.mxu0 0.0
    %2166 = vmatpush2.msra.mxu0 0.0
    %2167 = vmatprep.subr.mxu0 0.0
    %2168 = vmatpush2.msra.mxu0 0.0
    %2169 = vmatprep.subr.mxu0 0.0
    %2170 = vmatpush2.msra.mxu0 0.0
    %2171 = vmatprep.subr.mxu0 0.0
    %2172 = vmatpush2.msra.mxu0 0.0
    %2173 = vmatprep.subr.mxu0 0.0
    %2174 = vmatpush2.msra.mxu0 0.0
    %2175 = vmatprep.subr.mxu0 0.0
    %2176 = vmatpush2.msra.mxu0 0.0
    %2177 = vmatprep.subr.mxu0 0.0
    %2178 = vmatpush2.msra.mxu0 0.0
    %2179 = vmatprep.subr.mxu0 0.0
    %2180 = vmatpush2.msra.mxu0 0.0
    %2181 = vmatprep.subr.mxu0 0.0
    %2182 = vmatpush2.msra.mxu0 0.0
    %2183 = vmatprep.subr.mxu0 0.0
    %2184 = vmatpush2.msra.mxu0 0.0
    %2185 = vmatprep.subr.mxu0 0.0
    %2186 = vmatpush2.msra.mxu0 0.0
    %2187 = vmatprep.subr.mxu0 0.0
    %2188 = vmatpush2.msra.mxu0 0.0
    %2189 = vmatprep.subr.mxu0 0.0
    %2190 = vmatpush2.msra.mxu0 0.0
    %2191 = vmatprep.subr.mxu0 0.0
    %2192 = vmatpush2.msra.mxu0 0.0
    %2193 = vmatprep.mubr.f32.mxu0 0.0
    %2194 = vmatmul.mubr.f32.gmra.mxu0 %v2127
    %v2195 = vpop.f32.mrf.mxu0
    %v2196 = vadd.f32 0.0, %v2195
    %v2197 = vpop.f32.mrf.mxu0
    %2198 = vdwg.mxu0
    %v2200 = vsel %vm304, %v2196, 0
    %2202 = vmatprep.subr.mxu0 0.0
    %2203 = vmatpush1.msra.mxu0 0.0
    %2204 = vmatprep.subr.mxu0 0.0
    %2205 = vmatpush1.msra.mxu0 0.0
    %2206 = vmatprep.subr.mxu0 0.0
    %2207 = vmatpush1.msra.mxu0 0.0
    %2208 = vmatprep.subr.mxu0 0.0
    %2209 = vmatpush1.msra.mxu0 0.0
    %2210 = vmatprep.subr.mxu0 0.0
    %2211 = vmatpush1.msra.mxu0 0.0
    %2212 = vmatprep.subr.mxu0 0.0
    %2213 = vmatpush1.msra.mxu0 0.0
    %2214 = vmatprep.subr.mxu0 0.0
    %2215 = vmatpush1.msra.mxu0 0.0
    %2216 = vmatprep.subr.mxu0 0.0
    %2217 = vmatpush1.msra.mxu0 0.0
    %2218 = vmatprep.subr.mxu0 0.0
    %2219 = vmatpush1.msra.mxu0 0.0
    %2220 = vmatprep.subr.mxu0 0.0
    %2221 = vmatpush1.msra.mxu0 0.0
    %2222 = vmatprep.subr.mxu0 0.0
    %2223 = vmatpush1.msra.mxu0 0.0
    %2224 = vmatprep.subr.mxu0 0.0
    %2225 = vmatpush1.msra.mxu0 0.0
    %2226 = vmatprep.subr.mxu0 0.0
    %2227 = vmatpush1.msra.mxu0 0.0
    %2228 = vmatprep.subr.mxu0 0.0
    %2229 = vmatpush1.msra.mxu0 0.0
    %2230 = vmatprep.subr.mxu0 0.0
    %2231 = vmatpush1.msra.mxu0 0.0
    %2232 = vmatprep.subr.mxu0 0.0
    %2233 = vmatpush1.msra.mxu0 %v39
    %2234 = vmatprep.subr.mxu0 0.0
    %2235 = vmatpush2.msra.mxu0 0.0
    %2236 = vmatprep.subr.mxu0 0.0
    %2237 = vmatpush2.msra.mxu0 0.0
    %2238 = vmatprep.subr.mxu0 0.0
    %2239 = vmatpush2.msra.mxu0 0.0
    %2240 = vmatprep.subr.mxu0 0.0
    %2241 = vmatpush2.msra.mxu0 0.0
    %2242 = vmatprep.subr.mxu0 0.0
    %2243 = vmatpush2.msra.mxu0 0.0
    %2244 = vmatprep.subr.mxu0 0.0
    %2245 = vmatpush2.msra.mxu0 0.0
    %2246 = vmatprep.subr.mxu0 0.0
    %2247 = vmatpush2.msra.mxu0 0.0
    %2248 = vmatprep.subr.mxu0 0.0
    %2249 = vmatpush2.msra.mxu0 0.0
    %2250 = vmatprep.subr.mxu0 0.0
    %2251 = vmatpush2.msra.mxu0 0.0
    %2252 = vmatprep.subr.mxu0 0.0
    %2253 = vmatpush2.msra.mxu0 0.0
    %2254 = vmatprep.subr.mxu0 0.0
    %2255 = vmatpush2.msra.mxu0 0.0
    %2256 = vmatprep.subr.mxu0 0.0
    %2257 = vmatpush2.msra.mxu0 0.0
    %2258 = vmatprep.subr.mxu0 0.0
    %2259 = vmatpush2.msra.mxu0 0.0
    %2260 = vmatprep.subr.mxu0 0.0
    %2261 = vmatpush2.msra.mxu0 0.0
    %2262 = vmatprep.subr.mxu0 0.0
    %2263 = vmatpush2.msra.mxu0 0.0
    %2264 = vmatprep.subr.mxu0 0.0
    %2265 = vmatpush2.msra.mxu0 0.0
    %2266 = vmatprep.mubr.f32.mxu0 0.0
    %2267 = vmatmul.mubr.f32.gmra.mxu0 %v2200
    %v2268 = vpop.f32.mrf.mxu0
    %v2269 = vadd.f32 0.0, %v2268
    %v2270 = vpop.f32.mrf.mxu0
    %2271 = vdwg.mxu0
    %v2272 = vadd.f32 %v2119, %v2269
    %v2273 = vadd.f32 %v2272, %v1663
    %2274 = vst.msk [vmem:[#allocation2 + $0x8] sm:$0xff] %vm40, %v2273
    // Predicated region
    $region18: #{tpu_custom_call.1} parent=1 // pred_check
      _
    $region19: #{tpu_custom_call.1} parent=1 // pred_check_branch
      %2276 = sbr.rel (0) target = $region21
    $region20: #{tpu_custom_call.1} parent=1 // pred_region
      %s2278 = ssub.s32 256, 256
      %2279 = vsyncadd [#allocation3], %s2278
      %s2280 = sshll.u32 [#allocation2], 4
      %s2281 = int_to_ptr.vmem [resolvable:$true] %s2280
      %2286 = dma.vmem_to_hbm [thread:$0]  %s2281, 256, %s4, [#allocation3], 128, 128, 8
    $region21: #{tpu_custom_call.1} parent=1 // pred_fallthru
      _
    // Predicated region
    $region22: #{tpu_custom_call.1} parent=1 // pred_check
      _
    $region23: #{tpu_custom_call.1} parent=1 // pred_check_branch
      %2288 = sbr.rel (0) target = $region25
    $region24: #{tpu_custom_call.1} parent=1 // pred_region
      %2289 = dma.done [#allocation3], 256
    $region25: #{tpu_custom_call.1} parent=1 // pred_fallthru
      _
    %2290 = vsyncpa [#allocation3], 1

</llo_original>
